<compile_context>
chip_gen: v7x
topology: tpu7x:2x2x1
jax: 0.10.0
libtpu: 0.0.40
codegen_flags: <defaults>
</compile_context>

<pallas_src>
import jax
import jax.numpy as jnp
from jax import lax
from jax.experimental import pallas as pl
from jax.experimental.pallas import tpu as pltpu

C = 32                       # channel width
T = 30                       # required sequence length (conv stack must yield L=3)
K1, K2, K3 = 9, 5, 5
L1 = (T - K1) // 2 + 1       # 11
L2 = L1 - K2 + 1             # 7
L3 = L2 - K3 + 1             # 3

# Row offsets inside the single packed weight slab (lane width 64).
_R_CT1 = 0                       # (64, 64)  block-diag Linear #1
_R_CT2 = _R_CT1 + 2 * C          # (64, 64)  block-diag Linear #2
_R_W1A = _R_CT2 + 2 * C          # (256, 32) conv1 taps 0..7, pair-major im2col
_R_W1B = _R_W1A + (K1 - 1) * C   # (32, 32)  conv1 tap 8
_R_W2 = _R_W1B + C               # (160, 32) conv2 im2col
_R_W3 = _R_W2 + K2 * C           # (160, 32) conv3 im2col
_R_PW = _R_W3 + K3 * C           # (96, 32)  low_dim_proj (channel-major flatten absorbed)
_R_BCT1 = _R_PW + L3 * C         # (1, 64)   Linear #1 bias (pair-tiled)
_R_BCT2 = _R_BCT1 + 1            # (1, 64)   Linear #2 bias (pair-tiled)
_R_B1 = _R_BCT2 + 1              # conv1 bias
_R_B2 = _R_B1 + 1                # conv2 bias
_R_B3 = _R_B2 + 1                # conv3 bias
_R_BP = _R_B3 + 1                # proj bias (zero-padded to 32 lanes)
_ROWS = ((_R_BP + 1 + 7) // 8) * 8   # 840 (pad rows to a multiple of 8)


def proprio_adapt_kernel(x_ref, w_ref, out_ref):
    TB = x_ref.shape[1]
    f32 = jnp.float32
    bf16 = jnp.bfloat16

    # ---- channel_transform: two Linear(32,32)+ReLU, a pair of timesteps per
    #      row via the block-diagonal 64x64 packing (stride-2 of conv1 folded in).
    xm = x_ref[...].reshape((T // 2) * TB, 2 * C)                      # (15*TB, 64)
    h = jnp.dot(xm, w_ref[_R_CT1:_R_CT1 + 2 * C, :],
                preferred_element_type=f32)
    h = jnp.maximum(h + w_ref[_R_BCT1:_R_BCT1 + 1, :], 0.0).astype(bf16)
    h = jnp.dot(h, w_ref[_R_CT2:_R_CT2 + 2 * C, :],
                preferred_element_type=f32)
    h = jnp.maximum(h + w_ref[_R_BCT2:_R_BCT2 + 1, :], 0.0).astype(bf16)
    # h2[m, b, (t%2)*32 + c] == channel_transform(x)[b, 2m + (t%2), c]
    h2 = h.reshape(T // 2, TB, 2 * C)                                  # (15, TB, 64)

    # ---- Conv1d(32,32,k=9,s=2)+ReLU: taps 0..7 as ONE 256-deep im2col matmul
    #      (single full-depth MXU pass) plus a 32-deep tap-8 correction matmul,
    #      accumulated in f32 before bias + ReLU.
    win8 = jnp.concatenate([h2[m:m + L1] for m in range(K1 // 2)],
                           axis=-1).reshape(L1 * TB, (K1 - 1) * C)     # (11*TB, 256)
    win1 = h2[K1 // 2:K1 // 2 + L1, :, 0:C].reshape(L1 * TB, C)        # (11*TB, 32)
    y = (jnp.dot(win8, w_ref[_R_W1A:_R_W1A + (K1 - 1) * C, 0:C],
                 preferred_element_type=f32)
         + jnp.dot(win1, w_ref[_R_W1B:_R_W1B + C, 0:C],
                   preferred_element_type=f32)
         + w_ref[_R_B1:_R_B1 + 1, 0:C])
    y = jnp.maximum(y, 0.0).astype(bf16).reshape(L1, TB, C)            # (11, TB, 32)

    # ---- Conv1d(32,32,k=5,s=1)+ReLU: single im2col matmul (time-major slices
    #      are leading-dim offsets; (L,TB) collapse stays tile-aligned).
    win = jnp.concatenate([y[k:k + L2] for k in range(K2)],
                          axis=-1).reshape(L2 * TB, K2 * C)            # (7*TB, 160)
    y = jnp.dot(win, w_ref[_R_W2:_R_W2 + K2 * C, 0:C],
                preferred_element_type=f32)
    y = jnp.maximum(y + w_ref[_R_B2:_R_B2 + 1, 0:C], 0.0).astype(bf16)
    y = y.reshape(L2, TB, C)                                           # (7, TB, 32)

    # ---- Conv1d(32,32,k=5,s=1)+ReLU
    win = jnp.concatenate([y[k:k + L3] for k in range(K3)],
                          axis=-1).reshape(L3 * TB, K3 * C)            # (3*TB, 160)
    y = jnp.dot(win, w_ref[_R_W3:_R_W3 + K3 * C, 0:C],
                preferred_element_type=f32)
    y = jnp.maximum(y + w_ref[_R_B3:_R_B3 + 1, 0:C], 0.0).astype(bf16)
    y = y.reshape(L3, TB, C)                                           # (3, TB, 32)

    # ---- low_dim_proj: Linear(96, 8) zero-padded to 32 output lanes so the
    #      store is lane-dense; the wrapper slices [:, :8] with XLA.  PyTorch's
    #      channel-major flatten is absorbed into the packed (96, 32) weight.
    flat = jnp.concatenate([y[l] for l in range(L3)], axis=-1)         # (TB, 96)
    out = jnp.dot(flat, w_ref[_R_PW:_R_PW + L3 * C, 0:C],
                  preferred_element_type=f32)
    out_ref[...] = out + w_ref[_R_BP:_R_BP + 1, 0:C]                   # (TB, 32)


def _block_diag2(w):
    z = jnp.zeros_like(w)
    return jnp.concatenate(
        [jnp.concatenate([w, z], axis=1), jnp.concatenate([z, w], axis=1)], axis=0)


def _conv_pack(w):
    # PyTorch Conv1d weight (out, in, K) -> im2col layout (K*in, out)
    K = w.shape[2]
    return jnp.transpose(w, (2, 1, 0)).reshape(K * w.shape[1], w.shape[0])


def _pad_lanes(a, width):
    return jnp.pad(a, ((0, 0), (0, width - a.shape[1])))


_TB_MAX = 512   # rows per batch tile; bf16 activations keep the footprint well
                # under the v7x 64 MiB VMEM even with lane padding.


def _pick_batch_tile(B):
    if B <= 64:
        return B
    # >=2 (even) grid steps so "parallel" can shard the batch across both v7x
    # TensorCores; each tile <= _TB_MAX and a multiple of 8 so the in-kernel
    # (L, TB) reshape collapses stay (8,128)-tile aligned.
    n_steps = 2 * ((B + 2 * _TB_MAX - 1) // (2 * _TB_MAX))
    tb = -(-B // n_steps)
    return ((tb + 7) // 8) * 8


def proprio_adapt_tconv(x, params):
    """Packs PyTorch-layout weights into one bf16 slab and invokes the kernel."""
    (ct_w1, ct_b1, ct_w2, ct_b2,
     c1_w, c1_b, c2_w, c2_b, c3_w, c3_b,
     p_w, p_b) = params
    B, T_in, C_in = x.shape
    assert T_in == T and C_in == C, "ProprioAdaptTConv requires x of shape (B, 30, 32)"
    f32, bf16 = jnp.float32, jnp.bfloat16
    n_out = p_w.shape[0]                                              # 8
    W = 2 * C                                                         # slab lane width

    # conv1 taps 0..7 pair-major: row m*64 + (k%2)*32 + cin <-> c1_w[o, cin, 2m+k%2]
    w1a = _conv_pack(c1_w[:, :, :K1 - 1].astype(f32))                 # (256, 32)
    w1b = _conv_pack(c1_w[:, :, K1 - 1:].astype(f32))                 # (32, 32) tap 8
    # low_dim_proj: p_w[o, c*3 + l] -> pw[l*32 + c, o], zero-padded to 32 cols.
    pw = jnp.transpose(p_w.astype(f32).reshape(n_out, C, L3),
                       (2, 1, 0)).reshape(L3 * C, n_out)
    pw = jnp.pad(pw, ((0, 0), (0, C - n_out)))

    slab = jnp.concatenate([
        _block_diag2(ct_w1.T.astype(f32)),                            # (64, 64)
        _block_diag2(ct_w2.T.astype(f32)),                            # (64, 64)
        _pad_lanes(w1a, W),                                           # (256, 64)
        _pad_lanes(w1b, W),                                           # (32, 64)
        _pad_lanes(_conv_pack(c2_w.astype(f32)), W),                  # (160, 64)
        _pad_lanes(_conv_pack(c3_w.astype(f32)), W),                  # (160, 64)
        _pad_lanes(pw, W),                                            # (96, 64)
        jnp.tile(ct_b1.astype(f32), 2)[None, :],                      # (1, 64)
        jnp.tile(ct_b2.astype(f32), 2)[None, :],                      # (1, 64)
        _pad_lanes(c1_b.astype(f32)[None, :], W),
        _pad_lanes(c2_b.astype(f32)[None, :], W),
        _pad_lanes(c3_b.astype(f32)[None, :], W),
        _pad_lanes(jnp.pad(p_b.astype(f32), (0, C - n_out))[None, :], W),
        jnp.zeros((_ROWS - (_R_BP + 1), W), f32),                     # pad to 840 rows
    ], axis=0).astype(bf16)
    assert slab.shape == (_ROWS, W)

    # Time-major, pair-packed input: x2[m, b, :] = [x[b, 2m, :] | x[b, 2m+1, :]].
    # Leading time axis -> every conv window slice in the kernel is a free
    # leading-dim offset; no strided slicing or sublane repacks.
    x2 = jnp.transpose(x.astype(bf16).reshape(B, T // 2, 2, C),
                       (1, 0, 2, 3)).reshape(T // 2, B, 2 * C)

    TB = _pick_batch_tile(B)
    grid = (pl.cdiv(B, TB),)

    out = pl.pallas_call(
        proprio_adapt_kernel,
        out_shape=jax.ShapeDtypeStruct((B, C), f32),
        grid=grid,
        in_specs=[
            # Only streamed input; if its DMA ever shows up exposed at small TB,
            # add pipeline_mode=pl.Buffered(3) here.
            pl.BlockSpec((T // 2, TB, 2 * C), lambda i: (0, i, 0)),
            pl.BlockSpec((_ROWS, W), lambda i: (0, 0)),   # weights: DMA'd once
        ],
        out_specs=pl.BlockSpec((TB, C), lambda i: (i, 0)),
        compiler_params=pltpu.CompilerParams(
            dimension_semantics=("parallel",),
            vmem_limit_bytes=32 * 1024 * 1024),
    )(x2, slab)
    return out[:, :n_out]


def reference(x, params):
    """Plain-JAX (f32) mirror of the PyTorch forward (for validation)."""
    (ct_w1, ct_b1, ct_w2, ct_b2,
     c1_w, c1_b, c2_w, c2_b, c3_w, c3_b,
     p_w, p_b) = params
    h = jax.nn.relu(x @ ct_w1.T + ct_b1)
    h = jax.nn.relu(h @ ct_w2.T + ct_b2)
    h = jnp.transpose(h, (0, 2, 1))                  # (B, C, T) == permute(0,2,1)

    def conv(h, w, b, stride):
        y = lax.conv_general_dilated(h, w, (stride,), 'VALID',
                                     dimension_numbers=('NCH', 'OIH', 'NCH'))
        return jax.nn.relu(y + b[None, :, None])

    h = conv(h, c1_w, c1_b, 2)
    h = conv(h, c2_w, c2_b, 1)
    h = conv(h, c3_w, c3_b, 1)
    return h.reshape(h.shape[0], -1) @ p_w.T + p_b   # flatten(1) is channel-major


if __name__ == "__main__":
    key = jax.random.PRNGKey(0)
    keys = jax.random.split(key, 13)

    def init(k, shape, scale=0.1):
        return scale * jax.random.normal(k, shape, jnp.float32)

    params = (
        init(keys[1], (32, 32)),     init(keys[2], (32,), 0.01),   # Linear(32,32)
        init(keys[3], (32, 32)),     init(keys[4], (32,), 0.01),   # Linear(32,32)
        init(keys[5], (32, 32, 9)),  init(keys[6], (32,), 0.01),   # Conv1d k=9 s=2
        init(keys[7], (32, 32, 5)),  init(keys[8], (32,), 0.01),   # Conv1d k=5
        init(keys[9], (32, 32, 5)),  init(keys[10], (32,), 0.01),  # Conv1d k=5
        init(keys[11], (8, 96)),     init(keys[12], (8,), 0.01),   # Linear(96,8)
    )

    # B=2: small single-step grid.  B=80: exercises the TB>64 / two-step
    # (dual-TensorCore) grid path.
    for B in (2, 80):
        x = jax.random.normal(jax.random.fold_in(keys[0], B), (B, T, C), jnp.float32)
        out = proprio_adapt_tconv(x, params)
        jax.block_until_ready(out)
        ref = reference(x, params)
        assert out.shape == (B, 8), out.shape
        # bf16 inputs/weights with f32 accumulation -> loosened tolerance.
        if not jnp.allclose(out, ref, atol=1e-2, rtol=1e-2):
            err = float(jnp.max(jnp.abs(out - ref)))
            raise AssertionError(
                f"Pallas kernel does not match reference (B={B}, max err {err})")
    print("KERNEL_OK")
</pallas_src>

<mosaic_0001>
module attributes {stable_mosaic.version = 11 : i64} {
  func.func @proprio_adapt_kernel(%arg0: i32, %arg1: memref<15x2x64xbf16, #tpu.memory_space<vmem>>, %arg2: memref<840x64xbf16, #tpu.memory_space<vmem>>, %arg3: memref<2x32xf32, #tpu.memory_space<vmem>>) attributes {dimension_semantics = [#tpu.dimension_semantics<parallel>], iteration_bounds = array<i64: 1>, scalar_prefetch = 0 : i64, scratch_operands = 0 : i64, tpu.core_type = #tpu.core_type<tc>, window_params = [{transform_indices = @transform_0, window_bounds = array<i64: 15, 2, 64>}, {pipeline_mode = #tpu.pipeline_mode<synchronous>, transform_indices = @transform_1, window_bounds = array<i64: 840, 64>}, {transform_indices = @transform_2, window_bounds = array<i64: 2, 32>}]} {
    %c0 = arith.constant 0 : index
    %c0_0 = arith.constant 0 : index
    %c0_1 = arith.constant 0 : index
    %0 = vector.load %arg1[%c0, %c0_0, %c0_1] : memref<15x2x64xbf16, #tpu.memory_space<vmem>>, vector<15x2x64xbf16>
    %1 = vector.shape_cast %0 : vector<15x2x64xbf16> to vector<30x64xbf16>
    %c0_2 = arith.constant 0 : index
    %c0_3 = arith.constant 0 : index
    %2 = vector.load %arg2[%c0_2, %c0_3] : memref<840x64xbf16, #tpu.memory_space<vmem>>, vector<64x64xbf16>
    %cst = arith.constant dense<0.000000e+00> : vector<30x64xf32>
    %3 = tpu.matmul %1, %2, %cst {dimension_numbers = #tpu.dot_dimension_numbers<[1], [0], [0], [1], [0, 0, 1, 1], [], []>} : vector<30x64xbf16>, vector<64x64xbf16>, vector<30x64xf32> -> vector<30x64xf32>
    %c832 = arith.constant 832 : index
    %c0_4 = arith.constant 0 : index
    %4 = vector.load %arg2[%c832, %c0_4] : memref<840x64xbf16, #tpu.memory_space<vmem>>, vector<1x64xbf16>
    %5 = arith.extf %4 : vector<1x64xbf16> to vector<1x64xf32>
    %6 = vector.broadcast %5 : vector<1x64xf32> to vector<30x64xf32>
    %7 = arith.addf %3, %6 : vector<30x64xf32>
    %cst_5 = arith.constant 0.000000e+00 : f32
    %8 = vector.broadcast %cst_5 : f32 to vector<30x64xf32>
    %9 = arith.maximumf %7, %8 : vector<30x64xf32>
    %10 = arith.truncf %9 : vector<30x64xf32> to vector<30x64xbf16>
    %c64 = arith.constant 64 : index
    %c0_6 = arith.constant 0 : index
    %11 = vector.load %arg2[%c64, %c0_6] : memref<840x64xbf16, #tpu.memory_space<vmem>>, vector<64x64xbf16>
    %cst_7 = arith.constant dense<0.000000e+00> : vector<30x64xf32>
    %12 = tpu.matmul %10, %11, %cst_7 {dimension_numbers = #tpu.dot_dimension_numbers<[1], [0], [0], [1], [0, 0, 1, 1], [], []>} : vector<30x64xbf16>, vector<64x64xbf16>, vector<30x64xf32> -> vector<30x64xf32>
    %c833 = arith.constant 833 : index
    %c0_8 = arith.constant 0 : index
    %13 = vector.load %arg2[%c833, %c0_8] : memref<840x64xbf16, #tpu.memory_space<vmem>>, vector<1x64xbf16>
    %14 = arith.extf %13 : vector<1x64xbf16> to vector<1x64xf32>
    %15 = vector.broadcast %14 : vector<1x64xf32> to vector<30x64xf32>
    %16 = arith.addf %12, %15 : vector<30x64xf32>
    %cst_9 = arith.constant 0.000000e+00 : f32
    %17 = vector.broadcast %cst_9 : f32 to vector<30x64xf32>
    %18 = arith.maximumf %16, %17 : vector<30x64xf32>
    %19 = arith.truncf %18 : vector<30x64xf32> to vector<30x64xbf16>
    %20 = vector.shape_cast %19 : vector<30x64xbf16> to vector<15x2x64xbf16>
    %21 = vector.extract_strided_slice %20 {offsets = [0, 0, 0], sizes = [11, 2, 64], strides = [1, 1, 1]} : vector<15x2x64xbf16> to vector<11x2x64xbf16>
    %22 = vector.extract_strided_slice %20 {offsets = [1, 0, 0], sizes = [11, 2, 64], strides = [1, 1, 1]} : vector<15x2x64xbf16> to vector<11x2x64xbf16>
    %23 = vector.extract_strided_slice %20 {offsets = [2, 0, 0], sizes = [11, 2, 64], strides = [1, 1, 1]} : vector<15x2x64xbf16> to vector<11x2x64xbf16>
    %24 = vector.extract_strided_slice %20 {offsets = [3, 0, 0], sizes = [11, 2, 64], strides = [1, 1, 1]} : vector<15x2x64xbf16> to vector<11x2x64xbf16>
    %25 = tpu.concatenate %21, %22, %23, %24 in 2 : vector<11x2x64xbf16>, vector<11x2x64xbf16>, vector<11x2x64xbf16>, vector<11x2x64xbf16> -> vector<11x2x256xbf16>
    %26 = vector.shape_cast %25 : vector<11x2x256xbf16> to vector<22x256xbf16>
    %27 = vector.extract_strided_slice %20 {offsets = [4, 0, 0], sizes = [11, 2, 32], strides = [1, 1, 1]} : vector<15x2x64xbf16> to vector<11x2x32xbf16>
    %28 = vector.shape_cast %27 : vector<11x2x32xbf16> to vector<22x32xbf16>
    %c128 = arith.constant 128 : index
    %c0_10 = arith.constant 0 : index
    %29 = vector.load %arg2[%c128, %c0_10] : memref<840x64xbf16, #tpu.memory_space<vmem>>, vector<256x32xbf16>
    %cst_11 = arith.constant dense<0.000000e+00> : vector<22x32xf32>
    %30 = tpu.matmul %26, %29, %cst_11 {dimension_numbers = #tpu.dot_dimension_numbers<[1], [0], [0], [1], [0, 0, 1, 1], [], []>} : vector<22x256xbf16>, vector<256x32xbf16>, vector<22x32xf32> -> vector<22x32xf32>
    %c384 = arith.constant 384 : index
    %c0_12 = arith.constant 0 : index
    %31 = vector.load %arg2[%c384, %c0_12] : memref<840x64xbf16, #tpu.memory_space<vmem>>, vector<32x32xbf16>
    %cst_13 = arith.constant dense<0.000000e+00> : vector<22x32xf32>
    %32 = tpu.matmul %28, %31, %cst_13 {dimension_numbers = #tpu.dot_dimension_numbers<[1], [0], [0], [1], [0, 0, 1, 1], [], []>} : vector<22x32xbf16>, vector<32x32xbf16>, vector<22x32xf32> -> vector<22x32xf32>
    %33 = arith.addf %30, %32 : vector<22x32xf32>
    %c834 = arith.constant 834 : index
    %c0_14 = arith.constant 0 : index
    %34 = vector.load %arg2[%c834, %c0_14] : memref<840x64xbf16, #tpu.memory_space<vmem>>, vector<1x32xbf16>
    %35 = arith.extf %34 : vector<1x32xbf16> to vector<1x32xf32>
    %36 = vector.broadcast %35 : vector<1x32xf32> to vector<22x32xf32>
    %37 = arith.addf %33, %36 : vector<22x32xf32>
    %cst_15 = arith.constant 0.000000e+00 : f32
    %38 = vector.broadcast %cst_15 : f32 to vector<22x32xf32>
    %39 = arith.maximumf %37, %38 : vector<22x32xf32>
    %40 = arith.truncf %39 : vector<22x32xf32> to vector<22x32xbf16>
    %41 = vector.shape_cast %40 : vector<22x32xbf16> to vector<11x2x32xbf16>
    %42 = vector.extract_strided_slice %41 {offsets = [0, 0, 0], sizes = [7, 2, 32], strides = [1, 1, 1]} : vector<11x2x32xbf16> to vector<7x2x32xbf16>
    %43 = vector.extract_strided_slice %41 {offsets = [1, 0, 0], sizes = [7, 2, 32], strides = [1, 1, 1]} : vector<11x2x32xbf16> to vector<7x2x32xbf16>
    %44 = vector.extract_strided_slice %41 {offsets = [2, 0, 0], sizes = [7, 2, 32], strides = [1, 1, 1]} : vector<11x2x32xbf16> to vector<7x2x32xbf16>
    %45 = vector.extract_strided_slice %41 {offsets = [3, 0, 0], sizes = [7, 2, 32], strides = [1, 1, 1]} : vector<11x2x32xbf16> to vector<7x2x32xbf16>
    %46 = vector.extract_strided_slice %41 {offsets = [4, 0, 0], sizes = [7, 2, 32], strides = [1, 1, 1]} : vector<11x2x32xbf16> to vector<7x2x32xbf16>
    %47 = tpu.concatenate %42, %43, %44, %45, %46 in 2 : vector<7x2x32xbf16>, vector<7x2x32xbf16>, vector<7x2x32xbf16>, vector<7x2x32xbf16>, vector<7x2x32xbf16> -> vector<7x2x160xbf16>
    %48 = vector.shape_cast %47 : vector<7x2x160xbf16> to vector<14x160xbf16>
    %c416 = arith.constant 416 : index
    %c0_16 = arith.constant 0 : index
    %49 = vector.load %arg2[%c416, %c0_16] : memref<840x64xbf16, #tpu.memory_space<vmem>>, vector<160x32xbf16>
    %cst_17 = arith.constant dense<0.000000e+00> : vector<14x32xf32>
    %50 = tpu.matmul %48, %49, %cst_17 {dimension_numbers = #tpu.dot_dimension_numbers<[1], [0], [0], [1], [0, 0, 1, 1], [], []>} : vector<14x160xbf16>, vector<160x32xbf16>, vector<14x32xf32> -> vector<14x32xf32>
    %c835 = arith.constant 835 : index
    %c0_18 = arith.constant 0 : index
    %51 = vector.load %arg2[%c835, %c0_18] : memref<840x64xbf16, #tpu.memory_space<vmem>>, vector<1x32xbf16>
    %52 = arith.extf %51 : vector<1x32xbf16> to vector<1x32xf32>
    %53 = vector.broadcast %52 : vector<1x32xf32> to vector<14x32xf32>
    %54 = arith.addf %50, %53 : vector<14x32xf32>
    %cst_19 = arith.constant 0.000000e+00 : f32
    %55 = vector.broadcast %cst_19 : f32 to vector<14x32xf32>
    %56 = arith.maximumf %54, %55 : vector<14x32xf32>
    %57 = arith.truncf %56 : vector<14x32xf32> to vector<14x32xbf16>
    %58 = vector.shape_cast %57 : vector<14x32xbf16> to vector<7x2x32xbf16>
    %59 = vector.extract_strided_slice %58 {offsets = [0, 0, 0], sizes = [3, 2, 32], strides = [1, 1, 1]} : vector<7x2x32xbf16> to vector<3x2x32xbf16>
    %60 = vector.extract_strided_slice %58 {offsets = [1, 0, 0], sizes = [3, 2, 32], strides = [1, 1, 1]} : vector<7x2x32xbf16> to vector<3x2x32xbf16>
    %61 = vector.extract_strided_slice %58 {offsets = [2, 0, 0], sizes = [3, 2, 32], strides = [1, 1, 1]} : vector<7x2x32xbf16> to vector<3x2x32xbf16>
    %62 = vector.extract_strided_slice %58 {offsets = [3, 0, 0], sizes = [3, 2, 32], strides = [1, 1, 1]} : vector<7x2x32xbf16> to vector<3x2x32xbf16>
    %63 = vector.extract_strided_slice %58 {offsets = [4, 0, 0], sizes = [3, 2, 32], strides = [1, 1, 1]} : vector<7x2x32xbf16> to vector<3x2x32xbf16>
    %64 = tpu.concatenate %59, %60, %61, %62, %63 in 2 : vector<3x2x32xbf16>, vector<3x2x32xbf16>, vector<3x2x32xbf16>, vector<3x2x32xbf16>, vector<3x2x32xbf16> -> vector<3x2x160xbf16>
    %65 = vector.shape_cast %64 : vector<3x2x160xbf16> to vector<6x160xbf16>
    %c576 = arith.constant 576 : index
    %c0_20 = arith.constant 0 : index
    %66 = vector.load %arg2[%c576, %c0_20] : memref<840x64xbf16, #tpu.memory_space<vmem>>, vector<160x32xbf16>
    %cst_21 = arith.constant dense<0.000000e+00> : vector<6x32xf32>
    %67 = tpu.matmul %65, %66, %cst_21 {dimension_numbers = #tpu.dot_dimension_numbers<[1], [0], [0], [1], [0, 0, 1, 1], [], []>} : vector<6x160xbf16>, vector<160x32xbf16>, vector<6x32xf32> -> vector<6x32xf32>
    %c836 = arith.constant 836 : index
    %c0_22 = arith.constant 0 : index
    %68 = vector.load %arg2[%c836, %c0_22] : memref<840x64xbf16, #tpu.memory_space<vmem>>, vector<1x32xbf16>
    %69 = arith.extf %68 : vector<1x32xbf16> to vector<1x32xf32>
    %70 = vector.broadcast %69 : vector<1x32xf32> to vector<6x32xf32>
    %71 = arith.addf %67, %70 : vector<6x32xf32>
    %cst_23 = arith.constant 0.000000e+00 : f32
    %72 = vector.broadcast %cst_23 : f32 to vector<6x32xf32>
    %73 = arith.maximumf %71, %72 : vector<6x32xf32>
    %74 = arith.truncf %73 : vector<6x32xf32> to vector<6x32xbf16>
    %75 = vector.shape_cast %74 : vector<6x32xbf16> to vector<3x2x32xbf16>
    %76 = vector.extract_strided_slice %75 {offsets = [0, 0, 0], sizes = [1, 2, 32], strides = [1, 1, 1]} : vector<3x2x32xbf16> to vector<1x2x32xbf16>
    %77 = vector.shape_cast %76 : vector<1x2x32xbf16> to vector<2x32xbf16>
    %78 = vector.extract_strided_slice %75 {offsets = [1, 0, 0], sizes = [1, 2, 32], strides = [1, 1, 1]} : vector<3x2x32xbf16> to vector<1x2x32xbf16>
    %79 = vector.shape_cast %78 : vector<1x2x32xbf16> to vector<2x32xbf16>
    %80 = vector.extract_strided_slice %75 {offsets = [2, 0, 0], sizes = [1, 2, 32], strides = [1, 1, 1]} : vector<3x2x32xbf16> to vector<1x2x32xbf16>
    %81 = vector.shape_cast %80 : vector<1x2x32xbf16> to vector<2x32xbf16>
    %82 = tpu.concatenate %77, %79, %81 in 1 : vector<2x32xbf16>, vector<2x32xbf16>, vector<2x32xbf16> -> vector<2x96xbf16>
    %c736 = arith.constant 736 : index
    %c0_24 = arith.constant 0 : index
    %83 = vector.load %arg2[%c736, %c0_24] : memref<840x64xbf16, #tpu.memory_space<vmem>>, vector<96x32xbf16>
    %cst_25 = arith.constant dense<0.000000e+00> : vector<2x32xf32>
    %84 = tpu.matmul %82, %83, %cst_25 {dimension_numbers = #tpu.dot_dimension_numbers<[1], [0], [0], [1], [0, 0, 1, 1], [], []>} : vector<2x96xbf16>, vector<96x32xbf16>, vector<2x32xf32> -> vector<2x32xf32>
    %c837 = arith.constant 837 : index
    %c0_26 = arith.constant 0 : index
    %85 = vector.load %arg2[%c837, %c0_26] : memref<840x64xbf16, #tpu.memory_space<vmem>>, vector<1x32xbf16>
    %86 = arith.extf %85 : vector<1x32xbf16> to vector<1x32xf32>
    %87 = vector.broadcast %86 : vector<1x32xf32> to vector<2x32xf32>
    %88 = arith.addf %84, %87 : vector<2x32xf32>
    %c0_27 = arith.constant 0 : index
    %c0_28 = arith.constant 0 : index
    %89 = vector.load %arg3[%c0_27, %c0_28] : memref<2x32xf32, #tpu.memory_space<vmem>>, vector<2x32xf32>
    tpu.vector_store %arg3[%c0_27, %c0_28], %88 {strides = array<i32>} : memref<2x32xf32, #tpu.memory_space<vmem>>, vector<2x32xf32>,
    return
  }
  func.func @transform_0(%arg0: i32) -> (i32, i32, i32) {
    %c0_i32 = arith.constant 0 : i32
    %c0_i32_0 = arith.constant 0 : i32
    %c0_i32_1 = arith.constant 0 : i32
    return %c0_i32, %arg0, %c0_i32_0 : i32, i32, i32
  }
  func.func @transform_1(%arg0: i32) -> (i32, i32) {
    %c0_i32 = arith.constant 0 : i32
    %c0_i32_0 = arith.constant 0 : i32
    %c0_i32_1 = arith.constant 0 : i32
    return %c0_i32, %c0_i32_0 : i32, i32
  }
  func.func @transform_2(%arg0: i32) -> (i32, i32) {
    %c0_i32 = arith.constant 0 : i32
    %c0_i32_0 = arith.constant 0 : i32
    return %arg0, %c0_i32 : i32, i32
  }
}

</mosaic_0001>

<llo_original>
// kernel: tpu_custom_call.1
$region0: #{tpu_custom_call.1}
  #allocation0 [shape = 'u32[]', space=smem, size = 0x4, offset = 0x4, fixed_abs, tag = 'smem constant byte address 0x4 - core index']
  #allocation1 [shape = 'u32[144,128]{1,0:T(1,128)}', space=vmem, size = 0x12000, scoped, tag = 'internal scratch']
  %s0 = inlined_call_operand.vmem [shape: bf16[15,2,64], index: 0, kind: input, shape index: {}]
  %s1 = inlined_call_operand.vmem [shape: bf16[840,64], index: 1, kind: input, shape index: {}]
  %s2 = inlined_call_operand.hbm [shape: f32[2,32], index: 2, kind: output, shape index: {}]
  %s3 = sld [smem:[#allocation0]]
  $region18: #{tpu_custom_call.1} parent=0
    _
  %s5 = ssub.s32 1, %s3
  %s6 = scalar_select 0, %s5, %s3
  $region1: #{tpu_custom_call.1} parent=0
    #allocation2 [shape = 'u8[1024]{0}', space=vmem, size = 0x400, scoped, tag = 'output window, operand 0, single buffered']
    #allocation3 [shape = 's32[1]{0}', space=sflag, size = 0x4, scoped, tag = 'scoped memory for tpu_custom_call.1']
    %7 = vsyncpa [#allocation3], 0
    // Predicated region
    $region2: #{tpu_custom_call.1} parent=1 // pred_check
      _
    $region3: #{tpu_custom_call.1} parent=1 // pred_check_branch
      %9 = sbr.rel (0) target = $region5
    $region4: #{tpu_custom_call.1} parent=1 // pred_region
      _
    $region5: #{tpu_custom_call.1} parent=1 // pred_fallthru
      _
    // Predicated region
    $region6: #{tpu_custom_call.1} parent=1 // pred_check
      _
    $region7: #{tpu_custom_call.1} parent=1 // pred_check_branch
      %11 = sbr.rel (0) target = $region9
    $region8: #{tpu_custom_call.1} parent=1 // pred_region
      _
    $region9: #{tpu_custom_call.1} parent=1 // pred_fallthru
      _
    %v13 = vld [vmem:[%s0] sm:$0x1]
    %v14 = vld [vmem:[%s0 + $0x1] sm:$0x1]
    %v15 = vld [vmem:[%s0 + $0x2] sm:$0x1]
    %v16 = vld [vmem:[%s0 + $0x3] sm:$0x1]
    %v17 = vld [vmem:[%s0 + $0x4] sm:$0x1]
    %v18 = vld [vmem:[%s0 + $0x5] sm:$0x1]
    %v19 = vld [vmem:[%s0 + $0x6] sm:$0x1]
    %v20 = vld [vmem:[%s0 + $0x7] sm:$0x1]
    %v21 = vld [vmem:[%s0 + $0x8] sm:$0x1]
    %v22 = vld [vmem:[%s0 + $0x9] sm:$0x1]
    %v23 = vld [vmem:[%s0 + $0xa] sm:$0x1]
    %v24 = vld [vmem:[%s0 + $0xb] sm:$0x1]
    %v25 = vld [vmem:[%s0 + $0xc] sm:$0x1]
    %v26 = vld [vmem:[%s0 + $0xd] sm:$0x1]
    %v27 = vld [vmem:[%s0 + $0xe] sm:$0x1]
    %v28 = vld [vmem:[%s1] sm:$0xf]
    %v29 = vld [vmem:[%s1 + $0x4] sm:$0xf]
    %v30 = vld [vmem:[%s1 + $0x8] sm:$0xf]
    %v31 = vld [vmem:[%s1 + $0xc] sm:$0xf]
    %v32 = vld [vmem:[%s1 + $0x10] sm:$0xf]
    %v33 = vld [vmem:[%s1 + $0x14] sm:$0xf]
    %v34 = vld [vmem:[%s1 + $0x18] sm:$0xf]
    %v35 = vld [vmem:[%s1 + $0x1c] sm:$0xf]
    %v36 = vld [vmem:[%s1 + $0x1a0] sm:$0x1]
    %v37 = vunpack.c.l.bf16 %v36
    %v38 = vlaneseq
    %v39 = vshrl.u32 %v38, 7
    %v40 = vsub.s32 0, %v39
    %v41 = vrot.slane %v37, %v40
    %v57 = vcombine.low %v13, %v14
    %v58 = vcombine.low %v15, %v16
    %v59 = vcombine.low %v17, %v18
    %v60 = vcombine.low %v19, %v20
    %v62 = vunpack.c.l.s4 1966171168
    %v63 = vunpack.c.0.s8 %v62
    %v64 = vlaneseq
    %v65 = vshrl.u32 %v64, 7
    %v66 = vsub.s32 %v63, %v65
    %v67 = vrot.slane %v57, %v66
    %v69 = vunpack.c.l.s4 1966171168
    %v70 = vunpack.c.0.s8 %v69
    %v71 = vlaneseq
    %v72 = vshrl.u32 %v71, 7
    %v73 = vsub.s32 %v70, %v72
    %v74 = vrot.slane %v58, %v73
    %v76 = vunpack.c.l.s4 1966171168
    %v77 = vunpack.c.0.s8 %v76
    %v78 = vlaneseq
    %v79 = vshrl.u32 %v78, 7
    %v80 = vsub.s32 %v77, %v79
    %v81 = vrot.slane %v59, %v80
    %v83 = vunpack.c.l.s4 1966171168
    %v84 = vunpack.c.0.s8 %v83
    %v85 = vlaneseq
    %v86 = vshrl.u32 %v85, 7
    %v87 = vsub.s32 %v84, %v86
    %v88 = vrot.slane %v60, %v87
    %v89 = vcombine.low %v67, %v74
    %v90 = vcombine.low %v81, %v88
    %v92 = vunpack.c.l.s4 1966171168
    %v93 = vunpack.c.0.s8 %v92
    %v94 = vlaneseq
    %v95 = vshrl.u32 %v94, 7
    %v96 = vsub.s32 %v93, %v95
    %v97 = vrot.slane %v89, %v96
    %v99 = vunpack.c.l.s4 1966171168
    %v100 = vunpack.c.0.s8 %v99
    %v101 = vlaneseq
    %v102 = vshrl.u32 %v101, 7
    %v103 = vsub.s32 %v100, %v102
    %v104 = vrot.slane %v90, %v103
    %v105 = vcombine.low %v97, %v104
    %v106 = vcombine.low %v21, %v22
    %v107 = vcombine.low %v23, %v24
    %v108 = vcombine.low %v25, %v26
    %v110 = vunpack.c.l.s4 1966171168
    %v111 = vunpack.c.0.s8 %v110
    %v112 = vlaneseq
    %v113 = vshrl.u32 %v112, 7
    %v114 = vsub.s32 %v111, %v113
    %v115 = vrot.slane %v106, %v114
    %v117 = vunpack.c.l.s4 1966171168
    %v118 = vunpack.c.0.s8 %v117
    %v119 = vlaneseq
    %v120 = vshrl.u32 %v119, 7
    %v121 = vsub.s32 %v118, %v120
    %v122 = vrot.slane %v107, %v121
    %v124 = vunpack.c.l.s4 1966171168
    %v125 = vunpack.c.0.s8 %v124
    %v126 = vlaneseq
    %v127 = vshrl.u32 %v126, 7
    %v128 = vsub.s32 %v125, %v127
    %v129 = vrot.slane %v108, %v128
    %v131 = vunpack.c.l.s4 1966171168
    %v132 = vunpack.c.0.s8 %v131
    %v133 = vlaneseq
    %v134 = vshrl.u32 %v133, 7
    %v135 = vsub.s32 %v132, %v134
    %v136 = vrot.slane %v27, %v135
    %v137 = vcombine.low %v115, %v122
    %v138 = vcombine.low %v129, %v136
    %v140 = vunpack.c.l.s4 1966171168
    %v141 = vunpack.c.0.s8 %v140
    %v142 = vlaneseq
    %v143 = vshrl.u32 %v142, 7
    %v144 = vsub.s32 %v141, %v143
    %v145 = vrot.slane %v137, %v144
    %v147 = vunpack.c.l.s4 1966171168
    %v148 = vunpack.c.0.s8 %v147
    %v149 = vlaneseq
    %v150 = vshrl.u32 %v149, 7
    %v151 = vsub.s32 %v148, %v150
    %v152 = vrot.slane %v138, %v151
    %v153 = vcombine.low %v145, %v152
    %v162 = vunpack.c.l.b16 %v28
    %v163 = vunpack.c.l.b16 %v29
    %v164 = vunpack.c.l.b16 %v30
    %v165 = vunpack.c.l.b16 %v31
    %v166 = vunpack.c.l.b16 %v32
    %v167 = vunpack.c.l.b16 %v33
    %v168 = vunpack.c.l.b16 %v34
    %v169 = vunpack.c.l.b16 %v35
    %v170 = vpack.c.b16 %v163, %v162
    %v171 = vpack.c.b16 %v165, %v164
    %v172 = vpack.c.b16 %v167, %v166
    %v173 = vpack.c.b16 %v169, %v168
    %vm178 = vcmask 523264
    %v180 = vsel %vm178, %v105, 0
    %v183 = vsel %vm178, %v153, 0
    %185 = vmatprep.subr.bf16.mxu0 0
    %186 = vmatpush1.bf16.msra.mxu0 %v170
    %187 = vmatprep.subr.bf16.mxu0 0
    %188 = vmatpush1.bf16.msra.mxu0 %v171
    %189 = vmatprep.subr.bf16.mxu0 0
    %190 = vmatpush1.bf16.msra.mxu0 %v172
    %191 = vmatprep.subr.bf16.mxu0 0
    %192 = vmatpush1.bf16.msra.mxu0 %v173
    %193 = vmatprep.subr.bf16.mxu0 0
    %194 = vmatpush1.bf16.msra.mxu0 0
    %195 = vmatprep.subr.bf16.mxu0 0
    %196 = vmatpush1.bf16.msra.mxu0 0
    %197 = vmatprep.subr.bf16.mxu0 0
    %198 = vmatpush1.bf16.msra.mxu0 0
    %199 = vmatprep.subr.bf16.mxu0 0
    %200 = vmatpush1.bf16.msra.mxu0 0
    %201 = vmatprep.subr.bf16.mxu0 0
    %202 = vmatpush1.bf16.msra.mxu0 0
    %203 = vmatprep.subr.bf16.mxu0 0
    %204 = vmatpush1.bf16.msra.mxu0 0
    %205 = vmatprep.subr.bf16.mxu0 0
    %206 = vmatpush1.bf16.msra.mxu0 0
    %207 = vmatprep.subr.bf16.mxu0 0
    %208 = vmatpush1.bf16.msra.mxu0 0
    %209 = vmatprep.subr.bf16.mxu0 0
    %210 = vmatpush1.bf16.msra.mxu0 0
    %211 = vmatprep.subr.bf16.mxu0 0
    %212 = vmatpush1.bf16.msra.mxu0 0
    %213 = vmatprep.subr.bf16.mxu0 0
    %214 = vmatpush1.bf16.msra.mxu0 0
    %215 = vmatprep.subr.bf16.mxu0 0
    %216 = vmatpush1.bf16.msra.mxu0 0
    %217 = vmatprep.mubr.bf16.mxu0 0
    %218 = vmatmul.mubr.bf16.gmra.mrb[0].mxu0 %v180
    %v219 = vpop.f32.mrb[0].mxu0
    %v220 = vadd.f32 %v41, %v219
    %v221 = vpop.f32.mrb[0].mxu0
    %v222 = vpop.f32.mrb[0].mxu0
    %v223 = vadd.f32 %v41, %v222
    %v224 = vpop.f32.mrb[0].mxu0
    %225 = vmatprep.mubr.bf16.mxu0 0
    %226 = vmatmul.mubr.bf16.gmra.mrb[0].mxu0 %v183
    %v227 = vpop.f32.mrb[0].mxu0
    %v228 = vadd.f32 %v41, %v227
    %v229 = vpop.f32.mrb[0].mxu0
    %v230 = vpop.f32.mrb[0].mxu0
    %v231 = vadd.f32 %v41, %v230
    %v232 = vpop.f32.mrb[0].mxu0
    %233 = vdwg.mxu0
    %v234 = vmax.f32 %v220, 0.0
    %v235 = vmax.f32 %v223, 0.0
    %v236 = vmax.f32 %v228, 0.0
    %v237 = vmax.f32 %v231, 0.0
    %v238 = vpack.c.bf16 %v235, %v234
    %v239 = vpack.c.bf16 %v237, %v236
    %v240 = vld [vmem:[%s1 + $0x20] sm:$0xf]
    %v241 = vld [vmem:[%s1 + $0x24] sm:$0xf]
    %v242 = vld [vmem:[%s1 + $0x28] sm:$0xf]
    %v243 = vld [vmem:[%s1 + $0x2c] sm:$0xf]
    %v244 = vld [vmem:[%s1 + $0x30] sm:$0xf]
    %v245 = vld [vmem:[%s1 + $0x34] sm:$0xf]
    %v246 = vld [vmem:[%s1 + $0x38] sm:$0xf]
    %v247 = vld [vmem:[%s1 + $0x3c] sm:$0xf]
    %v248 = vld [vmem:[%s1 + $0x1a0] sm:$0x1]
    %v249 = vunpack.c.l.bf16 %v248
    %v250 = vlaneseq
    %v251 = vshrl.u32 %v250, 7
    %v252 = vsub.s32 1, %v251
    %v253 = vrot.slane %v249, %v252
    %v262 = vunpack.c.l.b16 %v240
    %v263 = vunpack.c.l.b16 %v241
    %v264 = vunpack.c.l.b16 %v242
    %v265 = vunpack.c.l.b16 %v243
    %v266 = vunpack.c.l.b16 %v244
    %v267 = vunpack.c.l.b16 %v245
    %v268 = vunpack.c.l.b16 %v246
    %v269 = vunpack.c.l.b16 %v247
    %v270 = vpack.c.b16 %v263, %v262
    %v271 = vpack.c.b16 %v265, %v264
    %v272 = vpack.c.b16 %v267, %v266
    %v273 = vpack.c.b16 %v269, %v268
    %v279 = vsel %vm178, %v238, 0
    %v282 = vsel %vm178, %v239, 0
    %284 = vmatprep.subr.bf16.mxu0 0
    %285 = vmatpush1.bf16.msra.mxu0 %v270
    %286 = vmatprep.subr.bf16.mxu0 0
    %287 = vmatpush1.bf16.msra.mxu0 %v271
    %288 = vmatprep.subr.bf16.mxu0 0
    %289 = vmatpush1.bf16.msra.mxu0 %v272
    %290 = vmatprep.subr.bf16.mxu0 0
    %291 = vmatpush1.bf16.msra.mxu0 %v273
    %292 = vmatprep.subr.bf16.mxu0 0
    %293 = vmatpush1.bf16.msra.mxu0 0
    %294 = vmatprep.subr.bf16.mxu0 0
    %295 = vmatpush1.bf16.msra.mxu0 0
    %296 = vmatprep.subr.bf16.mxu0 0
    %297 = vmatpush1.bf16.msra.mxu0 0
    %298 = vmatprep.subr.bf16.mxu0 0
    %299 = vmatpush1.bf16.msra.mxu0 0
    %300 = vmatprep.subr.bf16.mxu0 0
    %301 = vmatpush1.bf16.msra.mxu0 0
    %302 = vmatprep.subr.bf16.mxu0 0
    %303 = vmatpush1.bf16.msra.mxu0 0
    %304 = vmatprep.subr.bf16.mxu0 0
    %305 = vmatpush1.bf16.msra.mxu0 0
    %306 = vmatprep.subr.bf16.mxu0 0
    %307 = vmatpush1.bf16.msra.mxu0 0
    %308 = vmatprep.subr.bf16.mxu0 0
    %309 = vmatpush1.bf16.msra.mxu0 0
    %310 = vmatprep.subr.bf16.mxu0 0
    %311 = vmatpush1.bf16.msra.mxu0 0
    %312 = vmatprep.subr.bf16.mxu0 0
    %313 = vmatpush1.bf16.msra.mxu0 0
    %314 = vmatprep.subr.bf16.mxu0 0
    %315 = vmatpush1.bf16.msra.mxu0 0
    %316 = vmatprep.mubr.bf16.mxu0 0
    %317 = vmatmul.mubr.bf16.gmra.mrb[0].mxu0 %v279
    %v318 = vpop.f32.mrb[0].mxu0
    %v319 = vadd.f32 %v253, %v318
    %v320 = vpop.f32.mrb[0].mxu0
    %v321 = vpop.f32.mrb[0].mxu0
    %v322 = vadd.f32 %v253, %v321
    %v323 = vpop.f32.mrb[0].mxu0
    %324 = vmatprep.mubr.bf16.mxu0 0
    %325 = vmatmul.mubr.bf16.gmra.mrb[0].mxu0 %v282
    %v326 = vpop.f32.mrb[0].mxu0
    %v327 = vadd.f32 %v253, %v326
    %v328 = vpop.f32.mrb[0].mxu0
    %v329 = vpop.f32.mrb[0].mxu0
    %v330 = vadd.f32 %v253, %v329
    %v331 = vpop.f32.mrb[0].mxu0
    %332 = vdwg.mxu0
    %v333 = vmax.f32 %v319, 0.0
    %v334 = vmax.f32 %v322, 0.0
    %v335 = vmax.f32 %v327, 0.0
    %v336 = vmax.f32 %v330, 0.0
    %v337 = vpack.c.bf16 %v334, %v333
    %v338 = vpack.c.bf16 %v336, %v335
    %v341 = vcombine.high %v337, %v337
    %v343 = vunpack.c.l.s4 1966171168
    %v344 = vunpack.c.0.s8 %v343
    %v345 = vlaneseq
    %v346 = vshrl.u32 %v345, 7
    %v347 = vsub.s32 %v344, %v346
    %v348 = vrot.slane %v337, %v347
    %v350 = vunpack.c.l.s4 1966171168
    %v351 = vunpack.c.0.s8 %v350
    %v352 = vlaneseq
    %v353 = vshrl.u32 %v352, 7
    %v354 = vsub.s32 %v351, %v353
    %v355 = vrot.slane %v341, %v354
    %v356 = vcombine.high %v348, %v348
    %v357 = vcombine.high %v355, %v355
    %v359 = vunpack.c.l.s4 1966171168
    %v360 = vunpack.c.0.s8 %v359
    %v361 = vlaneseq
    %v362 = vshrl.u32 %v361, 7
    %v363 = vsub.s32 %v360, %v362
    %v364 = vrot.slane %v348, %v363
    %v366 = vunpack.c.l.s4 1966171168
    %v367 = vunpack.c.0.s8 %v366
    %v368 = vlaneseq
    %v369 = vshrl.u32 %v368, 7
    %v370 = vsub.s32 %v367, %v369
    %v371 = vrot.slane %v355, %v370
    %v373 = vunpack.c.l.s4 1966171168
    %v374 = vunpack.c.0.s8 %v373
    %v375 = vlaneseq
    %v376 = vshrl.u32 %v375, 7
    %v377 = vsub.s32 %v374, %v376
    %v378 = vrot.slane %v356, %v377
    %v380 = vunpack.c.l.s4 1966171168
    %v381 = vunpack.c.0.s8 %v380
    %v382 = vlaneseq
    %v383 = vshrl.u32 %v382, 7
    %v384 = vsub.s32 %v381, %v383
    %v385 = vrot.slane %v357, %v384
    %v386 = vcombine.high %v364, %v364
    %v387 = vcombine.high %v371, %v371
    %v388 = vcombine.high %v378, %v378
    %v389 = vcombine.high %v385, %v385
    %v390 = vcombine.high %v338, %v338
    %v392 = vunpack.c.l.s4 1966171168
    %v393 = vunpack.c.0.s8 %v392
    %v394 = vlaneseq
    %v395 = vshrl.u32 %v394, 7
    %v396 = vsub.s32 %v393, %v395
    %v397 = vrot.slane %v338, %v396
    %v399 = vunpack.c.l.s4 1966171168
    %v400 = vunpack.c.0.s8 %v399
    %v401 = vlaneseq
    %v402 = vshrl.u32 %v401, 7
    %v403 = vsub.s32 %v400, %v402
    %v404 = vrot.slane %v390, %v403
    %v405 = vcombine.high %v397, %v397
    %v406 = vcombine.high %v404, %v404
    %v408 = vunpack.c.l.s4 1966171168
    %v409 = vunpack.c.0.s8 %v408
    %v410 = vlaneseq
    %v411 = vshrl.u32 %v410, 7
    %v412 = vsub.s32 %v409, %v411
    %v413 = vrot.slane %v397, %v412
    %v415 = vunpack.c.l.s4 1966171168
    %v416 = vunpack.c.0.s8 %v415
    %v417 = vlaneseq
    %v418 = vshrl.u32 %v417, 7
    %v419 = vsub.s32 %v416, %v418
    %v420 = vrot.slane %v404, %v419
    %v422 = vunpack.c.l.s4 1966171168
    %v423 = vunpack.c.0.s8 %v422
    %v424 = vlaneseq
    %v425 = vshrl.u32 %v424, 7
    %v426 = vsub.s32 %v423, %v425
    %v427 = vrot.slane %v405, %v426
    %v429 = vunpack.c.l.s4 1966171168
    %v430 = vunpack.c.0.s8 %v429
    %v431 = vlaneseq
    %v432 = vshrl.u32 %v431, 7
    %v433 = vsub.s32 %v430, %v432
    %v434 = vrot.slane %v406, %v433
    %v435 = vcombine.high %v413, %v413
    %v436 = vcombine.high %v420, %v420
    %v437 = vcombine.high %v427, %v427
    %v439 = vunpack.c.l.s4 1966171168
    %v440 = vunpack.c.0.s8 %v439
    %v441 = vlaneseq
    %v442 = vshrl.u32 %v441, 7
    %v443 = vsub.s32 %v440, %v442
    %v444 = vrot.slane %v378, %v443
    %v446 = vunpack.c.l.s4 1966171168
    %v447 = vunpack.c.0.s8 %v446
    %v448 = vlaneseq
    %v449 = vshrl.u32 %v448, 7
    %v450 = vsub.s32 %v447, %v449
    %v451 = vrot.slane %v444, %v450
    %v453 = vunpack.c.l.s4 1966171168
    %v454 = vunpack.c.0.s8 %v453
    %v455 = vlaneseq
    %v456 = vshrl.u32 %v455, 7
    %v457 = vsub.s32 %v454, %v456
    %v458 = vrot.slane %v386, %v457
    %v460 = vunpack.c.l.s4 1966171168
    %v461 = vunpack.c.0.s8 %v460
    %v462 = vlaneseq
    %v463 = vshrl.u32 %v462, 7
    %v464 = vsub.s32 %v461, %v463
    %v465 = vrot.slane %v458, %v464
    %v467 = vunpack.c.l.s4 1966171168
    %v468 = vunpack.c.0.s8 %v467
    %v469 = vlaneseq
    %v470 = vshrl.u32 %v469, 7
    %v471 = vsub.s32 %v468, %v470
    %v472 = vrot.slane %v388, %v471
    %v474 = vunpack.c.l.s4 1966171168
    %v475 = vunpack.c.0.s8 %v474
    %v476 = vlaneseq
    %v477 = vshrl.u32 %v476, 7
    %v478 = vsub.s32 %v475, %v477
    %v479 = vrot.slane %v472, %v478
    %v481 = vunpack.c.l.s4 1966171168
    %v482 = vunpack.c.0.s8 %v481
    %v483 = vlaneseq
    %v484 = vshrl.u32 %v483, 7
    %v485 = vsub.s32 %v482, %v484
    %v486 = vrot.slane %v371, %v485
    %v488 = vunpack.c.l.s4 1966171168
    %v489 = vunpack.c.0.s8 %v488
    %v490 = vlaneseq
    %v491 = vshrl.u32 %v490, 7
    %v492 = vsub.s32 %v489, %v491
    %v493 = vrot.slane %v486, %v492
    %v495 = vunpack.c.l.s4 1966171168
    %v496 = vunpack.c.0.s8 %v495
    %v497 = vlaneseq
    %v498 = vshrl.u32 %v497, 7
    %v499 = vsub.s32 %v496, %v498
    %v500 = vrot.slane %v385, %v499
    %v502 = vunpack.c.l.s4 1966171168
    %v503 = vunpack.c.0.s8 %v502
    %v504 = vlaneseq
    %v505 = vshrl.u32 %v504, 7
    %v506 = vsub.s32 %v503, %v505
    %v507 = vrot.slane %v500, %v506
    %v509 = vunpack.c.l.s4 1966171168
    %v510 = vunpack.c.0.s8 %v509
    %v511 = vlaneseq
    %v512 = vshrl.u32 %v511, 7
    %v513 = vsub.s32 %v510, %v512
    %v514 = vrot.slane %v387, %v513
    %v516 = vunpack.c.l.s4 1966171168
    %v517 = vunpack.c.0.s8 %v516
    %v518 = vlaneseq
    %v519 = vshrl.u32 %v518, 7
    %v520 = vsub.s32 %v517, %v519
    %v521 = vrot.slane %v514, %v520
    %v523 = vunpack.c.l.s4 1966171168
    %v524 = vunpack.c.0.s8 %v523
    %v525 = vlaneseq
    %v526 = vshrl.u32 %v525, 7
    %v527 = vsub.s32 %v524, %v526
    %v528 = vrot.slane %v389, %v527
    %v530 = vunpack.c.l.s4 1966171168
    %v531 = vunpack.c.0.s8 %v530
    %v532 = vlaneseq
    %v533 = vshrl.u32 %v532, 7
    %v534 = vsub.s32 %v531, %v533
    %v535 = vrot.slane %v528, %v534
    %v537 = vunpack.c.l.s4 1966171168
    %v538 = vunpack.c.0.s8 %v537
    %v539 = vlaneseq
    %v540 = vshrl.u32 %v539, 7
    %v541 = vsub.s32 %v538, %v540
    %v542 = vrot.slane %v413, %v541
    %v544 = vunpack.c.l.s4 1966171168
    %v545 = vunpack.c.0.s8 %v544
    %v546 = vlaneseq
    %v547 = vshrl.u32 %v546, 7
    %v548 = vsub.s32 %v545, %v547
    %v549 = vrot.slane %v542, %v548
    %v551 = vunpack.c.l.s4 1966171168
    %v552 = vunpack.c.0.s8 %v551
    %v553 = vlaneseq
    %v554 = vshrl.u32 %v553, 7
    %v555 = vsub.s32 %v552, %v554
    %v556 = vrot.slane %v427, %v555
    %v558 = vunpack.c.l.s4 1966171168
    %v559 = vunpack.c.0.s8 %v558
    %v560 = vlaneseq
    %v561 = vshrl.u32 %v560, 7
    %v562 = vsub.s32 %v559, %v561
    %v563 = vrot.slane %v556, %v562
    %v565 = vunpack.c.l.s4 1966171168
    %v566 = vunpack.c.0.s8 %v565
    %v567 = vlaneseq
    %v568 = vshrl.u32 %v567, 7
    %v569 = vsub.s32 %v566, %v568
    %v570 = vrot.slane %v435, %v569
    %v572 = vunpack.c.l.s4 1966171168
    %v573 = vunpack.c.0.s8 %v572
    %v574 = vlaneseq
    %v575 = vshrl.u32 %v574, 7
    %v576 = vsub.s32 %v573, %v575
    %v577 = vrot.slane %v570, %v576
    %v579 = vunpack.c.l.s4 1966171168
    %v580 = vunpack.c.0.s8 %v579
    %v581 = vlaneseq
    %v582 = vshrl.u32 %v581, 7
    %v583 = vsub.s32 %v580, %v582
    %v584 = vrot.slane %v437, %v583
    %v586 = vunpack.c.l.s4 1966171168
    %v587 = vunpack.c.0.s8 %v586
    %v588 = vlaneseq
    %v589 = vshrl.u32 %v588, 7
    %v590 = vsub.s32 %v587, %v589
    %v591 = vrot.slane %v584, %v590
    %592 = vrot.lane.b32.xlu0 %v451, 64
    %v593 = vpop.permute.xlu0 %592
    %594 = vrot.lane.b32.xlu0 %v465, 64
    %v595 = vpop.permute.xlu0 %594
    %596 = vrot.lane.b32.xlu0 %v479, 64
    %v597 = vpop.permute.xlu0 %596
    %598 = vrot.lane.b32.xlu0 %v493, 64
    %v599 = vpop.permute.xlu0 %598
    %600 = vrot.lane.b32.xlu0 %v507, 64
    %v601 = vpop.permute.xlu0 %600
    %602 = vrot.lane.b32.xlu0 %v521, 64
    %v603 = vpop.permute.xlu0 %602
    %604 = vrot.lane.b32.xlu0 %v535, 64
    %v605 = vpop.permute.xlu0 %604
    %606 = vrot.lane.b32.xlu0 %v549, 64
    %v607 = vpop.permute.xlu0 %606
    %608 = vrot.lane.b32.xlu0 %v563, 64
    %v609 = vpop.permute.xlu0 %608
    %610 = vrot.lane.b32.xlu0 %v577, 64
    %v611 = vpop.permute.xlu0 %610
    %612 = vrot.lane.b32.xlu0 %v591, 64
    %v613 = vpop.permute.xlu0 %612
    %v615 = vunpack.c.l.s4 1966171168
    %v616 = vunpack.c.0.s8 %v615
    %v617 = vlaneseq
    %v618 = vshrl.u32 %v617, 7
    %v619 = vsub.s32 %v616, %v618
    %v620 = vrot.slane %v420, %v619
    %v622 = vunpack.c.l.s4 1966171168
    %v623 = vunpack.c.0.s8 %v622
    %v624 = vlaneseq
    %v625 = vshrl.u32 %v624, 7
    %v626 = vsub.s32 %v623, %v625
    %v627 = vrot.slane %v620, %v626
    %v629 = vunpack.c.l.s4 1966171168
    %v630 = vunpack.c.0.s8 %v629
    %v631 = vlaneseq
    %v632 = vshrl.u32 %v631, 7
    %v633 = vsub.s32 %v630, %v632
    %v634 = vrot.slane %v434, %v633
    %v636 = vunpack.c.l.s4 1966171168
    %v637 = vunpack.c.0.s8 %v636
    %v638 = vlaneseq
    %v639 = vshrl.u32 %v638, 7
    %v640 = vsub.s32 %v637, %v639
    %v641 = vrot.slane %v634, %v640
    %642 = vrot.lane.b32.xlu0 %v627, 64
    %v643 = vpop.permute.xlu0 %642
    %644 = vrot.lane.b32.xlu0 %v641, 64
    %v645 = vpop.permute.xlu0 %644
    %v648 = vsel %vm178, %v364, %v593
    %v651 = vsel %vm178, %v378, %v595
    %v654 = vsel %vm178, %v386, %v597
    %v657 = vsel %vm178, %v388, %v599
    %v660 = vsel %vm178, %v371, %v601
    %v663 = vsel %vm178, %v385, %v603
    %v666 = vsel %vm178, %v387, %v605
    %v669 = vsel %vm178, %v389, %v607
    %v672 = vsel %vm178, %v413, %v609
    %v675 = vsel %vm178, %v427, %v611
    %v678 = vsel %vm178, %v435, %v613
    %v681 = vsel %vm178, %v437, %v643
    %v684 = vsel %vm178, %v420, %v645
    %v698 = vcombine.low %v648, %v654
    %v700 = vunpack.c.l.s4 1966171168
    %v701 = vunpack.c.0.s8 %v700
    %v702 = vlaneseq
    %v703 = vshrl.u32 %v702, 7
    %v704 = vsub.s32 %v701, %v703
    %v705 = vrot.slane %v698, %v704
    %v707 = vunpack.c.l.s4 1966171168
    %v708 = vunpack.c.0.s8 %v707
    %v709 = vlaneseq
    %v710 = vshrl.u32 %v709, 7
    %v711 = vsub.s32 %v708, %v710
    %v712 = vrot.slane %v705, %v711
    %v713 = vcombine.low %v651, %v657
    %v715 = vunpack.c.l.s4 1966171168
    %v716 = vunpack.c.0.s8 %v715
    %v717 = vlaneseq
    %v718 = vshrl.u32 %v717, 7
    %v719 = vsub.s32 %v716, %v718
    %v720 = vrot.slane %v713, %v719
    %v722 = vunpack.c.l.s4 1966171168
    %v723 = vunpack.c.0.s8 %v722
    %v724 = vlaneseq
    %v725 = vshrl.u32 %v724, 7
    %v726 = vsub.s32 %v723, %v725
    %v727 = vrot.slane %v720, %v726
    %v728 = vcombine.low %v654, %v660
    %v730 = vunpack.c.l.s4 1966171168
    %v731 = vunpack.c.0.s8 %v730
    %v732 = vlaneseq
    %v733 = vshrl.u32 %v732, 7
    %v734 = vsub.s32 %v731, %v733
    %v735 = vrot.slane %v728, %v734
    %v737 = vunpack.c.l.s4 1966171168
    %v738 = vunpack.c.0.s8 %v737
    %v739 = vlaneseq
    %v740 = vshrl.u32 %v739, 7
    %v741 = vsub.s32 %v738, %v740
    %v742 = vrot.slane %v735, %v741
    %v743 = vcombine.low %v657, %v663
    %v745 = vunpack.c.l.s4 1966171168
    %v746 = vunpack.c.0.s8 %v745
    %v747 = vlaneseq
    %v748 = vshrl.u32 %v747, 7
    %v749 = vsub.s32 %v746, %v748
    %v750 = vrot.slane %v743, %v749
    %v752 = vunpack.c.l.s4 1966171168
    %v753 = vunpack.c.0.s8 %v752
    %v754 = vlaneseq
    %v755 = vshrl.u32 %v754, 7
    %v756 = vsub.s32 %v753, %v755
    %v757 = vrot.slane %v750, %v756
    %v758 = vcombine.low %v660, %v666
    %v760 = vunpack.c.l.s4 1966171168
    %v761 = vunpack.c.0.s8 %v760
    %v762 = vlaneseq
    %v763 = vshrl.u32 %v762, 7
    %v764 = vsub.s32 %v761, %v763
    %v765 = vrot.slane %v758, %v764
    %v767 = vunpack.c.l.s4 1966171168
    %v768 = vunpack.c.0.s8 %v767
    %v769 = vlaneseq
    %v770 = vshrl.u32 %v769, 7
    %v771 = vsub.s32 %v768, %v770
    %v772 = vrot.slane %v765, %v771
    %v773 = vcombine.low %v663, %v669
    %v775 = vunpack.c.l.s4 1966171168
    %v776 = vunpack.c.0.s8 %v775
    %v777 = vlaneseq
    %v778 = vshrl.u32 %v777, 7
    %v779 = vsub.s32 %v776, %v778
    %v780 = vrot.slane %v773, %v779
    %v782 = vunpack.c.l.s4 1966171168
    %v783 = vunpack.c.0.s8 %v782
    %v784 = vlaneseq
    %v785 = vshrl.u32 %v784, 7
    %v786 = vsub.s32 %v783, %v785
    %v787 = vrot.slane %v780, %v786
    %v788 = vcombine.low %v666, %v672
    %v790 = vunpack.c.l.s4 1966171168
    %v791 = vunpack.c.0.s8 %v790
    %v792 = vlaneseq
    %v793 = vshrl.u32 %v792, 7
    %v794 = vsub.s32 %v791, %v793
    %v795 = vrot.slane %v788, %v794
    %v797 = vunpack.c.l.s4 1966171168
    %v798 = vunpack.c.0.s8 %v797
    %v799 = vlaneseq
    %v800 = vshrl.u32 %v799, 7
    %v801 = vsub.s32 %v798, %v800
    %v802 = vrot.slane %v795, %v801
    %v803 = vcombine.low %v669, %v675
    %v805 = vunpack.c.l.s4 1966171168
    %v806 = vunpack.c.0.s8 %v805
    %v807 = vlaneseq
    %v808 = vshrl.u32 %v807, 7
    %v809 = vsub.s32 %v806, %v808
    %v810 = vrot.slane %v803, %v809
    %v812 = vunpack.c.l.s4 1966171168
    %v813 = vunpack.c.0.s8 %v812
    %v814 = vlaneseq
    %v815 = vshrl.u32 %v814, 7
    %v816 = vsub.s32 %v813, %v815
    %v817 = vrot.slane %v810, %v816
    %v818 = vcombine.low %v672, %v678
    %v820 = vunpack.c.l.s4 1966171168
    %v821 = vunpack.c.0.s8 %v820
    %v822 = vlaneseq
    %v823 = vshrl.u32 %v822, 7
    %v824 = vsub.s32 %v821, %v823
    %v825 = vrot.slane %v818, %v824
    %v827 = vunpack.c.l.s4 1966171168
    %v828 = vunpack.c.0.s8 %v827
    %v829 = vlaneseq
    %v830 = vshrl.u32 %v829, 7
    %v831 = vsub.s32 %v828, %v830
    %v832 = vrot.slane %v825, %v831
    %v833 = vcombine.low %v675, %v681
    %v835 = vunpack.c.l.s4 1966171168
    %v836 = vunpack.c.0.s8 %v835
    %v837 = vlaneseq
    %v838 = vshrl.u32 %v837, 7
    %v839 = vsub.s32 %v836, %v838
    %v840 = vrot.slane %v833, %v839
    %v842 = vunpack.c.l.s4 1966171168
    %v843 = vunpack.c.0.s8 %v842
    %v844 = vlaneseq
    %v845 = vshrl.u32 %v844, 7
    %v846 = vsub.s32 %v843, %v845
    %v847 = vrot.slane %v840, %v846
    %v848 = vcombine.low %v678, %v684
    %v850 = vunpack.c.l.s4 1966171168
    %v851 = vunpack.c.0.s8 %v850
    %v852 = vlaneseq
    %v853 = vshrl.u32 %v852, 7
    %v854 = vsub.s32 %v851, %v853
    %v855 = vrot.slane %v848, %v854
    %v857 = vunpack.c.l.s4 1966171168
    %v858 = vunpack.c.0.s8 %v857
    %v859 = vlaneseq
    %v860 = vshrl.u32 %v859, 7
    %v861 = vsub.s32 %v858, %v860
    %v862 = vrot.slane %v855, %v861
    %v863 = vld [vmem:[%s1 + $0x40] sm:$0xf]
    %v864 = vld [vmem:[%s1 + $0x44] sm:$0xf]
    %v865 = vld [vmem:[%s1 + $0x48] sm:$0xf]
    %v866 = vld [vmem:[%s1 + $0x4c] sm:$0xf]
    %v867 = vld [vmem:[%s1 + $0x50] sm:$0xf]
    %v868 = vld [vmem:[%s1 + $0x54] sm:$0xf]
    %v869 = vld [vmem:[%s1 + $0x58] sm:$0xf]
    %v870 = vld [vmem:[%s1 + $0x5c] sm:$0xf]
    %v871 = vld [vmem:[%s1 + $0x60] sm:$0xf]
    %v872 = vld [vmem:[%s1 + $0x64] sm:$0xf]
    %v873 = vld [vmem:[%s1 + $0x68] sm:$0xf]
    %v874 = vld [vmem:[%s1 + $0x6c] sm:$0xf]
    %v875 = vld [vmem:[%s1 + $0x70] sm:$0xf]
    %v876 = vld [vmem:[%s1 + $0x74] sm:$0xf]
    %v877 = vld [vmem:[%s1 + $0x78] sm:$0xf]
    %v878 = vld [vmem:[%s1 + $0x7c] sm:$0xf]
    %v879 = vld [vmem:[%s1 + $0x80] sm:$0xf]
    %v880 = vld [vmem:[%s1 + $0x84] sm:$0xf]
    %v881 = vld [vmem:[%s1 + $0x88] sm:$0xf]
    %v882 = vld [vmem:[%s1 + $0x8c] sm:$0xf]
    %v883 = vld [vmem:[%s1 + $0x90] sm:$0xf]
    %v884 = vld [vmem:[%s1 + $0x94] sm:$0xf]
    %v885 = vld [vmem:[%s1 + $0x98] sm:$0xf]
    %v886 = vld [vmem:[%s1 + $0x9c] sm:$0xf]
    %v887 = vld [vmem:[%s1 + $0xa0] sm:$0xf]
    %v888 = vld [vmem:[%s1 + $0xa4] sm:$0xf]
    %v889 = vld [vmem:[%s1 + $0xa8] sm:$0xf]
    %v890 = vld [vmem:[%s1 + $0xac] sm:$0xf]
    %v891 = vld [vmem:[%s1 + $0xb0] sm:$0xf]
    %v892 = vld [vmem:[%s1 + $0xb4] sm:$0xf]
    %v893 = vld [vmem:[%s1 + $0xb8] sm:$0xf]
    %v894 = vld [vmem:[%s1 + $0xbc] sm:$0xf]
    %v895 = vld [vmem:[%s1 + $0xc0] sm:$0xf]
    %v896 = vld [vmem:[%s1 + $0xc4] sm:$0xf]
    %v897 = vld [vmem:[%s1 + $0xc8] sm:$0xf]
    %v898 = vld [vmem:[%s1 + $0xcc] sm:$0xf]
    %v899 = vcombine.low %v371, %v385
    %v900 = vcombine.low %v387, %v389
    %v901 = vcombine.low %v413, %v427
    %v902 = vcombine.low %v435, %v437
    %v904 = vunpack.c.l.s4 1966171168
    %v905 = vunpack.c.0.s8 %v904
    %v906 = vlaneseq
    %v907 = vshrl.u32 %v906, 7
    %v908 = vsub.s32 %v905, %v907
    %v909 = vrot.slane %v899, %v908
    %v911 = vunpack.c.l.s4 1966171168
    %v912 = vunpack.c.0.s8 %v911
    %v913 = vlaneseq
    %v914 = vshrl.u32 %v913, 7
    %v915 = vsub.s32 %v912, %v914
    %v916 = vrot.slane %v900, %v915
    %v918 = vunpack.c.l.s4 1966171168
    %v919 = vunpack.c.0.s8 %v918
    %v920 = vlaneseq
    %v921 = vshrl.u32 %v920, 7
    %v922 = vsub.s32 %v919, %v921
    %v923 = vrot.slane %v901, %v922
    %v925 = vunpack.c.l.s4 1966171168
    %v926 = vunpack.c.0.s8 %v925
    %v927 = vlaneseq
    %v928 = vshrl.u32 %v927, 7
    %v929 = vsub.s32 %v926, %v928
    %v930 = vrot.slane %v902, %v929
    %v931 = vcombine.low %v909, %v916
    %v932 = vcombine.low %v923, %v930
    %v934 = vunpack.c.l.s4 1966171168
    %v935 = vunpack.c.0.s8 %v934
    %v936 = vlaneseq
    %v937 = vshrl.u32 %v936, 7
    %v938 = vsub.s32 %v935, %v937
    %v939 = vrot.slane %v931, %v938
    %v941 = vunpack.c.l.s4 1966171168
    %v942 = vunpack.c.0.s8 %v941
    %v943 = vlaneseq
    %v944 = vshrl.u32 %v943, 7
    %v945 = vsub.s32 %v942, %v944
    %v946 = vrot.slane %v932, %v945
    %v947 = vcombine.low %v939, %v946
    %v948 = vcombine.low %v420, %v434
    %v950 = vunpack.c.l.s4 1966171168
    %v951 = vunpack.c.0.s8 %v950
    %v952 = vlaneseq
    %v953 = vshrl.u32 %v952, 7
    %v954 = vsub.s32 %v951, %v953
    %v955 = vrot.slane %v948, %v954
    %v957 = vunpack.c.l.s4 1966171168
    %v958 = vunpack.c.0.s8 %v957
    %v959 = vlaneseq
    %v960 = vshrl.u32 %v959, 7
    %v961 = vsub.s32 %v958, %v960
    %v962 = vrot.slane %v436, %v961
    %v963 = vcombine.low %v955, %v962
    %v965 = vunpack.c.l.s4 1966171168
    %v966 = vunpack.c.0.s8 %v965
    %v967 = vlaneseq
    %v968 = vshrl.u32 %v967, 7
    %v969 = vsub.s32 %v966, %v968
    %v970 = vrot.slane %v963, %v969
    %v975 = vunpack.c.l.b16 %v895
    %v976 = vunpack.c.l.b16 %v896
    %v977 = vunpack.c.l.b16 %v897
    %v978 = vunpack.c.l.b16 %v898
    %v979 = vpack.c.b16 %v976, %v975
    %v980 = vpack.c.b16 %v978, %v977
    %vm983 = vcmask 261120
    %v985 = vsel %vm983, %v947, 0
    %v988 = vsel %vm983, %v970, 0
    %990 = vmatprep.subr.bf16.mxu0 0
    %991 = vmatpush1.bf16.msra.mxu0 %v979
    %992 = vmatprep.subr.bf16.mxu0 0
    %993 = vmatpush1.bf16.msra.mxu0 %v980
    %994 = vmatprep.subr.bf16.mxu0 0
    %995 = vmatpush1.bf16.msra.mxu0 0
    %996 = vmatprep.subr.bf16.mxu0 0
    %997 = vmatpush1.bf16.msra.mxu0 0
    %998 = vmatprep.subr.bf16.mxu0 0
    %999 = vmatpush1.bf16.msra.mxu0 0
    %1000 = vmatprep.subr.bf16.mxu0 0
    %1001 = vmatpush1.bf16.msra.mxu0 0
    %1002 = vmatprep.subr.bf16.mxu0 0
    %1003 = vmatpush1.bf16.msra.mxu0 0
    %1004 = vmatprep.subr.bf16.mxu0 0
    %1005 = vmatpush1.bf16.msra.mxu0 0
    %1006 = vmatprep.subr.bf16.mxu0 0
    %1007 = vmatpush1.bf16.msra.mxu0 0
    %1008 = vmatprep.subr.bf16.mxu0 0
    %1009 = vmatpush1.bf16.msra.mxu0 0
    %1010 = vmatprep.subr.bf16.mxu0 0
    %1011 = vmatpush1.bf16.msra.mxu0 0
    %1012 = vmatprep.subr.bf16.mxu0 0
    %1013 = vmatpush1.bf16.msra.mxu0 0
    %1014 = vmatprep.subr.bf16.mxu0 0
    %1015 = vmatpush1.bf16.msra.mxu0 0
    %1016 = vmatprep.subr.bf16.mxu0 0
    %1017 = vmatpush1.bf16.msra.mxu0 0
    %1018 = vmatprep.subr.bf16.mxu0 0
    %1019 = vmatpush1.bf16.msra.mxu0 0
    %1020 = vmatprep.subr.bf16.mxu0 0
    %1021 = vmatpush1.bf16.msra.mxu0 0
    %1022 = vmatprep.mubr.bf16.mxu0 0
    %1023 = vmatmul.mubr.bf16.gmra.mrb[0].mxu0 %v985
    %v1024 = vpop.f32.mrb[0].mxu0
    %v1025 = vadd.f32 0.0, %v1024
    %v1026 = vpop.f32.mrb[0].mxu0
    %v1027 = vpop.f32.mrb[0].mxu0
    %v1028 = vadd.f32 0.0, %v1027
    %v1029 = vpop.f32.mrb[0].mxu0
    %1030 = vmatprep.mubr.bf16.mxu0 0
    %1031 = vmatmul.mubr.bf16.gmra.mrb[0].mxu0 %v988
    %v1032 = vpop.f32.mrb[0].mxu0
    %v1033 = vadd.f32 0.0, %v1032
    %v1034 = vpop.f32.mrb[0].mxu0
    %v1035 = vpop.f32.mrb[0].mxu0
    %v1036 = vpop.f32.mrb[0].mxu0
    %1037 = vdwg.mxu0
    %v1038 = vcombine.low %v712, %v727
    %v1039 = vcombine.low %v742, %v757
    %v1040 = vcombine.low %v772, %v787
    %v1041 = vcombine.low %v802, %v817
    %v1043 = vunpack.c.l.s4 1966171168
    %v1044 = vunpack.c.0.s8 %v1043
    %v1045 = vlaneseq
    %v1046 = vshrl.u32 %v1045, 7
    %v1047 = vsub.s32 %v1044, %v1046
    %v1048 = vrot.slane %v1038, %v1047
    %v1050 = vunpack.c.l.s4 1966171168
    %v1051 = vunpack.c.0.s8 %v1050
    %v1052 = vlaneseq
    %v1053 = vshrl.u32 %v1052, 7
    %v1054 = vsub.s32 %v1051, %v1053
    %v1055 = vrot.slane %v1039, %v1054
    %v1057 = vunpack.c.l.s4 1966171168
    %v1058 = vunpack.c.0.s8 %v1057
    %v1059 = vlaneseq
    %v1060 = vshrl.u32 %v1059, 7
    %v1061 = vsub.s32 %v1058, %v1060
    %v1062 = vrot.slane %v1040, %v1061
    %v1064 = vunpack.c.l.s4 1966171168
    %v1065 = vunpack.c.0.s8 %v1064
    %v1066 = vlaneseq
    %v1067 = vshrl.u32 %v1066, 7
    %v1068 = vsub.s32 %v1065, %v1067
    %v1069 = vrot.slane %v1041, %v1068
    %v1070 = vcombine.low %v1048, %v1055
    %v1071 = vcombine.high %v1048, %v1055
    %v1072 = vcombine.low %v1062, %v1069
    %v1073 = vcombine.high %v1062, %v1069
    %v1075 = vunpack.c.l.s4 1966171168
    %v1076 = vunpack.c.0.s8 %v1075
    %v1077 = vlaneseq
    %v1078 = vshrl.u32 %v1077, 7
    %v1079 = vsub.s32 %v1076, %v1078
    %v1080 = vrot.slane %v1070, %v1079
    %v1082 = vunpack.c.l.s4 1966171168
    %v1083 = vunpack.c.0.s8 %v1082
    %v1084 = vlaneseq
    %v1085 = vshrl.u32 %v1084, 7
    %v1086 = vsub.s32 %v1083, %v1085
    %v1087 = vrot.slane %v1071, %v1086
    %v1089 = vunpack.c.l.s4 1966171168
    %v1090 = vunpack.c.0.s8 %v1089
    %v1091 = vlaneseq
    %v1092 = vshrl.u32 %v1091, 7
    %v1093 = vsub.s32 %v1090, %v1092
    %v1094 = vrot.slane %v1072, %v1093
    %v1096 = vunpack.c.l.s4 1966171168
    %v1097 = vunpack.c.0.s8 %v1096
    %v1098 = vlaneseq
    %v1099 = vshrl.u32 %v1098, 7
    %v1100 = vsub.s32 %v1097, %v1099
    %v1101 = vrot.slane %v1073, %v1100
    %v1102 = vcombine.low %v1080, %v1094
    %v1103 = vcombine.low %v1087, %v1101
    %v1104 = vcombine.low %v832, %v847
    %v1106 = vunpack.c.l.s4 1966171168
    %v1107 = vunpack.c.0.s8 %v1106
    %v1108 = vlaneseq
    %v1109 = vshrl.u32 %v1108, 7
    %v1110 = vsub.s32 %v1107, %v1109
    %v1111 = vrot.slane %v1104, %v1110
    %v1113 = vunpack.c.l.s4 1966171168
    %v1114 = vunpack.c.0.s8 %v1113
    %v1115 = vlaneseq
    %v1116 = vshrl.u32 %v1115, 7
    %v1117 = vsub.s32 %v1114, %v1116
    %v1118 = vrot.slane %v862, %v1117
    %v1119 = vcombine.low %v1111, %v1118
    %v1120 = vcombine.high %v1111, %v1118
    %v1122 = vunpack.c.l.s4 1966171168
    %v1123 = vunpack.c.0.s8 %v1122
    %v1124 = vlaneseq
    %v1125 = vshrl.u32 %v1124, 7
    %v1126 = vsub.s32 %v1123, %v1125
    %v1127 = vrot.slane %v1119, %v1126
    %v1129 = vunpack.c.l.s4 1966171168
    %v1130 = vunpack.c.0.s8 %v1129
    %v1131 = vlaneseq
    %v1132 = vshrl.u32 %v1131, 7
    %v1133 = vsub.s32 %v1130, %v1132
    %v1134 = vrot.slane %v1120, %v1133
    %v1171 = vunpack.c.l.b16 %v863
    %v1172 = vunpack.c.l.b16 %v864
    %v1173 = vunpack.c.l.b16 %v865
    %v1174 = vunpack.c.l.b16 %v866
    %v1175 = vunpack.c.l.b16 %v867
    %v1176 = vunpack.c.l.b16 %v868
    %v1177 = vunpack.c.l.b16 %v869
    %v1178 = vunpack.c.l.b16 %v870
    %v1179 = vunpack.c.l.b16 %v871
    %v1180 = vunpack.c.l.b16 %v872
    %v1181 = vunpack.c.l.b16 %v873
    %v1182 = vunpack.c.l.b16 %v874
    %v1183 = vunpack.c.l.b16 %v875
    %v1184 = vunpack.c.l.b16 %v876
    %v1185 = vunpack.c.l.b16 %v877
    %v1186 = vunpack.c.l.b16 %v878
    %v1187 = vunpack.c.l.b16 %v879
    %v1188 = vunpack.c.l.b16 %v880
    %v1189 = vunpack.c.l.b16 %v881
    %v1190 = vunpack.c.l.b16 %v882
    %v1191 = vunpack.c.l.b16 %v883
    %v1192 = vunpack.c.l.b16 %v884
    %v1193 = vunpack.c.l.b16 %v885
    %v1194 = vunpack.c.l.b16 %v886
    %v1195 = vunpack.c.l.b16 %v887
    %v1196 = vunpack.c.l.b16 %v888
    %v1197 = vunpack.c.l.b16 %v889
    %v1198 = vunpack.c.l.b16 %v890
    %v1199 = vunpack.c.l.b16 %v891
    %v1200 = vunpack.c.l.b16 %v892
    %v1201 = vunpack.c.l.b16 %v893
    %v1202 = vunpack.c.l.b16 %v894
    %v1203 = vpack.c.b16 %v1172, %v1171
    %v1204 = vpack.c.b16 %v1174, %v1173
    %v1205 = vpack.c.b16 %v1176, %v1175
    %v1206 = vpack.c.b16 %v1178, %v1177
    %v1207 = vpack.c.b16 %v1180, %v1179
    %v1208 = vpack.c.b16 %v1182, %v1181
    %v1209 = vpack.c.b16 %v1184, %v1183
    %v1210 = vpack.c.b16 %v1186, %v1185
    %v1211 = vpack.c.b16 %v1188, %v1187
    %v1212 = vpack.c.b16 %v1190, %v1189
    %v1213 = vpack.c.b16 %v1192, %v1191
    %v1214 = vpack.c.b16 %v1194, %v1193
    %v1215 = vpack.c.b16 %v1196, %v1195
    %v1216 = vpack.c.b16 %v1198, %v1197
    %v1217 = vpack.c.b16 %v1200, %v1199
    %v1218 = vpack.c.b16 %v1202, %v1201
    %1235 = vmatprep.subr.bf16.mxu0 0
    %1236 = vmatpush1.bf16.msra.mxu0 %v1203
    %1237 = vmatprep.subr.bf16.mxu0 0
    %1238 = vmatpush1.bf16.msra.mxu0 %v1204
    %1239 = vmatprep.subr.bf16.mxu0 0
    %1240 = vmatpush1.bf16.msra.mxu0 %v1205
    %1241 = vmatprep.subr.bf16.mxu0 0
    %1242 = vmatpush1.bf16.msra.mxu0 %v1206
    %1243 = vmatprep.subr.bf16.mxu0 0
    %1244 = vmatpush1.bf16.msra.mxu0 %v1207
    %1245 = vmatprep.subr.bf16.mxu0 0
    %1246 = vmatpush1.bf16.msra.mxu0 %v1208
    %1247 = vmatprep.subr.bf16.mxu0 0
    %1248 = vmatpush1.bf16.msra.mxu0 %v1209
    %1249 = vmatprep.subr.bf16.mxu0 0
    %1250 = vmatpush1.bf16.msra.mxu0 %v1210
    %1251 = vmatprep.subr.bf16.mxu0 0
    %1252 = vmatpush1.bf16.msra.mxu0 %v1211
    %1253 = vmatprep.subr.bf16.mxu0 0
    %1254 = vmatpush1.bf16.msra.mxu0 %v1212
    %1255 = vmatprep.subr.bf16.mxu0 0
    %1256 = vmatpush1.bf16.msra.mxu0 %v1213
    %1257 = vmatprep.subr.bf16.mxu0 0
    %1258 = vmatpush1.bf16.msra.mxu0 %v1214
    %1259 = vmatprep.subr.bf16.mxu0 0
    %1260 = vmatpush1.bf16.msra.mxu0 %v1215
    %1261 = vmatprep.subr.bf16.mxu0 0
    %1262 = vmatpush1.bf16.msra.mxu0 %v1216
    %1263 = vmatprep.subr.bf16.mxu0 0
    %1264 = vmatpush1.bf16.msra.mxu0 %v1217
    %1265 = vmatprep.subr.bf16.mxu0 0
    %1266 = vmatpush1.bf16.msra.mxu0 %v1218
    %1267 = vmatprep.mubr.bf16.mxu0 %v1103
    %1268 = vmatmul.mubr.bf16.gmra.mrb[0].mxu0 %v1102
    %v1269 = vpop.f32.mrb[0].mxu0
    %v1270 = vadd.f32 %v1025, %v1269
    %v1271 = vpop.f32.mrb[0].mxu0
    %v1272 = vpop.f32.mrb[0].mxu0
    %v1273 = vadd.f32 %v1028, %v1272
    %v1274 = vpop.f32.mrb[0].mxu0
    %1275 = vmatprep.mubr.bf16.mxu0 %v1134
    %1276 = vmatmul.mubr.bf16.gmra.mrb[0].mxu0 %v1127
    %v1277 = vpop.f32.mrb[0].mxu0
    %v1278 = vadd.f32 %v1033, %v1277
    %v1279 = vpop.f32.mrb[0].mxu0
    %v1280 = vpop.f32.mrb[0].mxu0
    %v1281 = vpop.f32.mrb[0].mxu0
    %1282 = vdwg.mxu0
    %v1283 = vld [vmem:[%s1 + $0x1a0] sm:$0x2]
    %v1284 = vunpack.c.l.bf16 %v1283
    %v1285 = vlaneseq
    %v1286 = vshrl.u32 %v1285, 7
    %v1287 = vsub.s32 2, %v1286
    %v1288 = vrot.slane %v1284, %v1287
    %v1289 = vadd.f32 %v1270, %v1288
    %v1290 = vadd.f32 %v1273, %v1288
    %v1291 = vadd.f32 %v1278, %v1288
    %v1292 = vmax.f32 %v1289, 0.0
    %v1293 = vmax.f32 %v1290, 0.0
    %v1294 = vmax.f32 %v1291, 0.0
    %v1295 = vpack.c.bf16 %v1293, %v1292
    %v1296 = vpack.c.bf16 %v1294, %v1294
    %v1299 = vcombine.high %v1295, %v1295
    %v1301 = vunpack.c.l.s4 1966171168
    %v1302 = vunpack.c.0.s8 %v1301
    %v1303 = vlaneseq
    %v1304 = vshrl.u32 %v1303, 7
    %v1305 = vsub.s32 %v1302, %v1304
    %v1306 = vrot.slane %v1295, %v1305
    %v1308 = vunpack.c.l.s4 1966171168
    %v1309 = vunpack.c.0.s8 %v1308
    %v1310 = vlaneseq
    %v1311 = vshrl.u32 %v1310, 7
    %v1312 = vsub.s32 %v1309, %v1311
    %v1313 = vrot.slane %v1299, %v1312
    %v1314 = vcombine.high %v1306, %v1306
    %v1315 = vcombine.high %v1313, %v1313
    %v1317 = vunpack.c.l.s4 1966171168
    %v1318 = vunpack.c.0.s8 %v1317
    %v1319 = vlaneseq
    %v1320 = vshrl.u32 %v1319, 7
    %v1321 = vsub.s32 %v1318, %v1320
    %v1322 = vrot.slane %v1306, %v1321
    %v1324 = vunpack.c.l.s4 1966171168
    %v1325 = vunpack.c.0.s8 %v1324
    %v1326 = vlaneseq
    %v1327 = vshrl.u32 %v1326, 7
    %v1328 = vsub.s32 %v1325, %v1327
    %v1329 = vrot.slane %v1313, %v1328
    %v1331 = vunpack.c.l.s4 1966171168
    %v1332 = vunpack.c.0.s8 %v1331
    %v1333 = vlaneseq
    %v1334 = vshrl.u32 %v1333, 7
    %v1335 = vsub.s32 %v1332, %v1334
    %v1336 = vrot.slane %v1314, %v1335
    %v1338 = vunpack.c.l.s4 1966171168
    %v1339 = vunpack.c.0.s8 %v1338
    %v1340 = vlaneseq
    %v1341 = vshrl.u32 %v1340, 7
    %v1342 = vsub.s32 %v1339, %v1341
    %v1343 = vrot.slane %v1315, %v1342
    %v1344 = vcombine.high %v1322, %v1322
    %v1345 = vcombine.high %v1329, %v1329
    %v1346 = vcombine.high %v1336, %v1336
    %v1347 = vcombine.high %v1343, %v1343
    %v1349 = vunpack.c.l.s4 1966171168
    %v1350 = vunpack.c.0.s8 %v1349
    %v1351 = vlaneseq
    %v1352 = vshrl.u32 %v1351, 7
    %v1353 = vsub.s32 %v1350, %v1352
    %v1354 = vrot.slane %v1296, %v1353
    %v1355 = vcombine.high %v1354, %v1354
    %v1357 = vunpack.c.l.s4 1966171168
    %v1358 = vunpack.c.0.s8 %v1357
    %v1359 = vlaneseq
    %v1360 = vshrl.u32 %v1359, 7
    %v1361 = vsub.s32 %v1358, %v1360
    %v1362 = vrot.slane %v1354, %v1361
    %v1364 = vunpack.c.l.s4 1966171168
    %v1365 = vunpack.c.0.s8 %v1364
    %v1366 = vlaneseq
    %v1367 = vshrl.u32 %v1366, 7
    %v1368 = vsub.s32 %v1365, %v1367
    %v1369 = vrot.slane %v1355, %v1368
    %v1370 = vcombine.high %v1362, %v1362
    %v1372 = vunpack.c.l.s4 1966171168
    %v1373 = vunpack.c.0.s8 %v1372
    %v1374 = vlaneseq
    %v1375 = vshrl.u32 %v1374, 7
    %v1376 = vsub.s32 %v1373, %v1375
    %v1377 = vrot.slane %v1336, %v1376
    %v1379 = vunpack.c.l.s4 1966171168
    %v1380 = vunpack.c.0.s8 %v1379
    %v1381 = vlaneseq
    %v1382 = vshrl.u32 %v1381, 7
    %v1383 = vsub.s32 %v1380, %v1382
    %v1384 = vrot.slane %v1377, %v1383
    %v1386 = vunpack.c.l.s4 1966171168
    %v1387 = vunpack.c.0.s8 %v1386
    %v1388 = vlaneseq
    %v1389 = vshrl.u32 %v1388, 7
    %v1390 = vsub.s32 %v1387, %v1389
    %v1391 = vrot.slane %v1344, %v1390
    %v1393 = vunpack.c.l.s4 1966171168
    %v1394 = vunpack.c.0.s8 %v1393
    %v1395 = vlaneseq
    %v1396 = vshrl.u32 %v1395, 7
    %v1397 = vsub.s32 %v1394, %v1396
    %v1398 = vrot.slane %v1391, %v1397
    %v1400 = vunpack.c.l.s4 1966171168
    %v1401 = vunpack.c.0.s8 %v1400
    %v1402 = vlaneseq
    %v1403 = vshrl.u32 %v1402, 7
    %v1404 = vsub.s32 %v1401, %v1403
    %v1405 = vrot.slane %v1346, %v1404
    %v1407 = vunpack.c.l.s4 1966171168
    %v1408 = vunpack.c.0.s8 %v1407
    %v1409 = vlaneseq
    %v1410 = vshrl.u32 %v1409, 7
    %v1411 = vsub.s32 %v1408, %v1410
    %v1412 = vrot.slane %v1405, %v1411
    %v1414 = vunpack.c.l.s4 1966171168
    %v1415 = vunpack.c.0.s8 %v1414
    %v1416 = vlaneseq
    %v1417 = vshrl.u32 %v1416, 7
    %v1418 = vsub.s32 %v1415, %v1417
    %v1419 = vrot.slane %v1329, %v1418
    %v1421 = vunpack.c.l.s4 1966171168
    %v1422 = vunpack.c.0.s8 %v1421
    %v1423 = vlaneseq
    %v1424 = vshrl.u32 %v1423, 7
    %v1425 = vsub.s32 %v1422, %v1424
    %v1426 = vrot.slane %v1419, %v1425
    %v1428 = vunpack.c.l.s4 1966171168
    %v1429 = vunpack.c.0.s8 %v1428
    %v1430 = vlaneseq
    %v1431 = vshrl.u32 %v1430, 7
    %v1432 = vsub.s32 %v1429, %v1431
    %v1433 = vrot.slane %v1343, %v1432
    %v1435 = vunpack.c.l.s4 1966171168
    %v1436 = vunpack.c.0.s8 %v1435
    %v1437 = vlaneseq
    %v1438 = vshrl.u32 %v1437, 7
    %v1439 = vsub.s32 %v1436, %v1438
    %v1440 = vrot.slane %v1433, %v1439
    %v1442 = vunpack.c.l.s4 1966171168
    %v1443 = vunpack.c.0.s8 %v1442
    %v1444 = vlaneseq
    %v1445 = vshrl.u32 %v1444, 7
    %v1446 = vsub.s32 %v1443, %v1445
    %v1447 = vrot.slane %v1345, %v1446
    %v1449 = vunpack.c.l.s4 1966171168
    %v1450 = vunpack.c.0.s8 %v1449
    %v1451 = vlaneseq
    %v1452 = vshrl.u32 %v1451, 7
    %v1453 = vsub.s32 %v1450, %v1452
    %v1454 = vrot.slane %v1447, %v1453
    %v1456 = vunpack.c.l.s4 1966171168
    %v1457 = vunpack.c.0.s8 %v1456
    %v1458 = vlaneseq
    %v1459 = vshrl.u32 %v1458, 7
    %v1460 = vsub.s32 %v1457, %v1459
    %v1461 = vrot.slane %v1347, %v1460
    %v1463 = vunpack.c.l.s4 1966171168
    %v1464 = vunpack.c.0.s8 %v1463
    %v1465 = vlaneseq
    %v1466 = vshrl.u32 %v1465, 7
    %v1467 = vsub.s32 %v1464, %v1466
    %v1468 = vrot.slane %v1461, %v1467
    %1469 = vrot.lane.b32.xlu0 %v1384, 32
    %v1470 = vpop.permute.xlu0 %1469
    %1471 = vrot.lane.b32.xlu0 %v1398, 32
    %v1472 = vpop.permute.xlu0 %1471
    %1473 = vrot.lane.b32.xlu0 %v1412, 32
    %v1474 = vpop.permute.xlu0 %1473
    %1475 = vrot.lane.b32.xlu0 %v1426, 32
    %v1476 = vpop.permute.xlu0 %1475
    %1477 = vrot.lane.b32.xlu0 %v1440, 32
    %v1478 = vpop.permute.xlu0 %1477
    %1479 = vrot.lane.b32.xlu0 %v1454, 32
    %v1480 = vpop.permute.xlu0 %1479
    %1481 = vrot.lane.b32.xlu0 %v1468, 32
    %v1482 = vpop.permute.xlu0 %1481
    %v1484 = vunpack.c.l.s4 1966171168
    %v1485 = vunpack.c.0.s8 %v1484
    %v1486 = vlaneseq
    %v1487 = vshrl.u32 %v1486, 7
    %v1488 = vsub.s32 %v1485, %v1487
    %v1489 = vrot.slane %v1362, %v1488
    %v1491 = vunpack.c.l.s4 1966171168
    %v1492 = vunpack.c.0.s8 %v1491
    %v1493 = vlaneseq
    %v1494 = vshrl.u32 %v1493, 7
    %v1495 = vsub.s32 %v1492, %v1494
    %v1496 = vrot.slane %v1489, %v1495
    %1497 = vrot.lane.b32.xlu0 %v1398, 64
    %v1498 = vpop.permute.xlu0 %1497
    %1499 = vrot.lane.b32.xlu0 %v1412, 64
    %v1500 = vpop.permute.xlu0 %1499
    %1501 = vrot.lane.b32.xlu0 %v1426, 64
    %v1502 = vpop.permute.xlu0 %1501
    %1503 = vrot.lane.b32.xlu0 %v1440, 64
    %v1504 = vpop.permute.xlu0 %1503
    %1505 = vrot.lane.b32.xlu0 %v1454, 64
    %v1506 = vpop.permute.xlu0 %1505
    %1507 = vrot.lane.b32.xlu0 %v1468, 64
    %v1508 = vpop.permute.xlu0 %1507
    %1509 = vrot.lane.b32.xlu0 %v1496, 64
    %v1510 = vpop.permute.xlu0 %1509
    %v1512 = vunpack.c.l.s4 1966171168
    %v1513 = vunpack.c.0.s8 %v1512
    %v1514 = vlaneseq
    %v1515 = vshrl.u32 %v1514, 7
    %v1516 = vsub.s32 %v1513, %v1515
    %v1517 = vrot.slane %v1369, %v1516
    %v1519 = vunpack.c.l.s4 1966171168
    %v1520 = vunpack.c.0.s8 %v1519
    %v1521 = vlaneseq
    %v1522 = vshrl.u32 %v1521, 7
    %v1523 = vsub.s32 %v1520, %v1522
    %v1524 = vrot.slane %v1517, %v1523
    %1525 = vrot.lane.b32.xlu0 %v1412, 96
    %v1526 = vpop.permute.xlu0 %1525
    %1527 = vrot.lane.b32.xlu0 %v1426, 96
    %v1528 = vpop.permute.xlu0 %1527
    %1529 = vrot.lane.b32.xlu0 %v1440, 96
    %v1530 = vpop.permute.xlu0 %1529
    %1531 = vrot.lane.b32.xlu0 %v1454, 96
    %v1532 = vpop.permute.xlu0 %1531
    %1533 = vrot.lane.b32.xlu0 %v1468, 96
    %v1534 = vpop.permute.xlu0 %1533
    %1535 = vrot.lane.b32.xlu0 %v1496, 96
    %v1536 = vpop.permute.xlu0 %1535
    %1537 = vrot.lane.b32.xlu0 %v1524, 96
    %v1538 = vpop.permute.xlu0 %1537
    %v1541 = vsel %vm983, %v1322, %v1470
    %v1544 = vsel %vm983, %v1336, %v1472
    %v1547 = vsel %vm983, %v1344, %v1474
    %v1550 = vsel %vm983, %v1346, %v1476
    %v1553 = vsel %vm983, %v1329, %v1478
    %v1556 = vsel %vm983, %v1343, %v1480
    %v1559 = vsel %vm983, %v1345, %v1482
    %v1561 = vsel %vm178, %v1541, %v1498
    %v1563 = vsel %vm178, %v1544, %v1500
    %v1565 = vsel %vm178, %v1547, %v1502
    %v1567 = vsel %vm178, %v1550, %v1504
    %v1569 = vsel %vm178, %v1553, %v1506
    %v1571 = vsel %vm178, %v1556, %v1508
    %v1573 = vsel %vm178, %v1559, %v1510
    %vm1574 = vcmask 785408
    %v1576 = vsel %vm1574, %v1561, %v1526
    %v1578 = vsel %vm1574, %v1563, %v1528
    %v1580 = vsel %vm1574, %v1565, %v1530
    %v1582 = vsel %vm1574, %v1567, %v1532
    %v1584 = vsel %vm1574, %v1569, %v1534
    %v1586 = vsel %vm1574, %v1571, %v1536
    %v1588 = vsel %vm1574, %v1573, %v1538
    %v1596 = vcombine.low %v1576, %v1329
    %v1598 = vunpack.c.l.s4 1966171168
    %v1599 = vunpack.c.0.s8 %v1598
    %v1600 = vlaneseq
    %v1601 = vshrl.u32 %v1600, 7
    %v1602 = vsub.s32 %v1599, %v1601
    %v1603 = vrot.slane %v1596, %v1602
    %v1605 = vunpack.c.l.s4 1966171168
    %v1606 = vunpack.c.0.s8 %v1605
    %v1607 = vlaneseq
    %v1608 = vshrl.u32 %v1607, 7
    %v1609 = vsub.s32 %v1606, %v1608
    %v1610 = vrot.slane %v1603, %v1609
    %v1611 = vcombine.low %v1578, %v1343
    %v1613 = vunpack.c.l.s4 1966171168
    %v1614 = vunpack.c.0.s8 %v1613
    %v1615 = vlaneseq
    %v1616 = vshrl.u32 %v1615, 7
    %v1617 = vsub.s32 %v1614, %v1616
    %v1618 = vrot.slane %v1611, %v1617
    %v1620 = vunpack.c.l.s4 1966171168
    %v1621 = vunpack.c.0.s8 %v1620
    %v1622 = vlaneseq
    %v1623 = vshrl.u32 %v1622, 7
    %v1624 = vsub.s32 %v1621, %v1623
    %v1625 = vrot.slane %v1618, %v1624
    %v1626 = vcombine.low %v1580, %v1345
    %v1628 = vunpack.c.l.s4 1966171168
    %v1629 = vunpack.c.0.s8 %v1628
    %v1630 = vlaneseq
    %v1631 = vshrl.u32 %v1630, 7
    %v1632 = vsub.s32 %v1629, %v1631
    %v1633 = vrot.slane %v1626, %v1632
    %v1635 = vunpack.c.l.s4 1966171168
    %v1636 = vunpack.c.0.s8 %v1635
    %v1637 = vlaneseq
    %v1638 = vshrl.u32 %v1637, 7
    %v1639 = vsub.s32 %v1636, %v1638
    %v1640 = vrot.slane %v1633, %v1639
    %v1641 = vcombine.low %v1582, %v1347
    %v1643 = vunpack.c.l.s4 1966171168
    %v1644 = vunpack.c.0.s8 %v1643
    %v1645 = vlaneseq
    %v1646 = vshrl.u32 %v1645, 7
    %v1647 = vsub.s32 %v1644, %v1646
    %v1648 = vrot.slane %v1641, %v1647
    %v1650 = vunpack.c.l.s4 1966171168
    %v1651 = vunpack.c.0.s8 %v1650
    %v1652 = vlaneseq
    %v1653 = vshrl.u32 %v1652, 7
    %v1654 = vsub.s32 %v1651, %v1653
    %v1655 = vrot.slane %v1648, %v1654
    %v1656 = vcombine.low %v1584, %v1362
    %v1658 = vunpack.c.l.s4 1966171168
    %v1659 = vunpack.c.0.s8 %v1658
    %v1660 = vlaneseq
    %v1661 = vshrl.u32 %v1660, 7
    %v1662 = vsub.s32 %v1659, %v1661
    %v1663 = vrot.slane %v1656, %v1662
    %v1665 = vunpack.c.l.s4 1966171168
    %v1666 = vunpack.c.0.s8 %v1665
    %v1667 = vlaneseq
    %v1668 = vshrl.u32 %v1667, 7
    %v1669 = vsub.s32 %v1666, %v1668
    %v1670 = vrot.slane %v1663, %v1669
    %v1671 = vcombine.low %v1586, %v1369
    %v1673 = vunpack.c.l.s4 1966171168
    %v1674 = vunpack.c.0.s8 %v1673
    %v1675 = vlaneseq
    %v1676 = vshrl.u32 %v1675, 7
    %v1677 = vsub.s32 %v1674, %v1676
    %v1678 = vrot.slane %v1671, %v1677
    %v1680 = vunpack.c.l.s4 1966171168
    %v1681 = vunpack.c.0.s8 %v1680
    %v1682 = vlaneseq
    %v1683 = vshrl.u32 %v1682, 7
    %v1684 = vsub.s32 %v1681, %v1683
    %v1685 = vrot.slane %v1678, %v1684
    %v1686 = vcombine.low %v1588, %v1370
    %v1688 = vunpack.c.l.s4 1966171168
    %v1689 = vunpack.c.0.s8 %v1688
    %v1690 = vlaneseq
    %v1691 = vshrl.u32 %v1690, 7
    %v1692 = vsub.s32 %v1689, %v1691
    %v1693 = vrot.slane %v1686, %v1692
    %v1695 = vunpack.c.l.s4 1966171168
    %v1696 = vunpack.c.0.s8 %v1695
    %v1697 = vlaneseq
    %v1698 = vshrl.u32 %v1697, 7
    %v1699 = vsub.s32 %v1696, %v1698
    %v1700 = vrot.slane %v1693, %v1699
    %v1701 = vld [vmem:[%s1 + $0xd0] sm:$0xf]
    %v1702 = vld [vmem:[%s1 + $0xd4] sm:$0xf]
    %v1703 = vld [vmem:[%s1 + $0xd8] sm:$0xf]
    %v1704 = vld [vmem:[%s1 + $0xdc] sm:$0xf]
    %v1705 = vld [vmem:[%s1 + $0xe0] sm:$0xf]
    %v1706 = vld [vmem:[%s1 + $0xe4] sm:$0xf]
    %v1707 = vld [vmem:[%s1 + $0xe8] sm:$0xf]
    %v1708 = vld [vmem:[%s1 + $0xec] sm:$0xf]
    %v1709 = vld [vmem:[%s1 + $0xf0] sm:$0xf]
    %v1710 = vld [vmem:[%s1 + $0xf4] sm:$0xf]
    %v1711 = vld [vmem:[%s1 + $0xf8] sm:$0xf]
    %v1712 = vld [vmem:[%s1 + $0xfc] sm:$0xf]
    %v1713 = vld [vmem:[%s1 + $0x100] sm:$0xf]
    %v1714 = vld [vmem:[%s1 + $0x104] sm:$0xf]
    %v1715 = vld [vmem:[%s1 + $0x108] sm:$0xf]
    %v1716 = vld [vmem:[%s1 + $0x10c] sm:$0xf]
    %v1717 = vld [vmem:[%s1 + $0x110] sm:$0xf]
    %v1718 = vld [vmem:[%s1 + $0x114] sm:$0xf]
    %v1719 = vld [vmem:[%s1 + $0x118] sm:$0xf]
    %v1720 = vld [vmem:[%s1 + $0x11c] sm:$0xf]
    %v1721 = vlaneseq
    %v1722 = vshrl.u32 %v1721, 7
    %v1723 = vsub.s32 3, %v1722
    %v1724 = vrot.slane %v1284, %v1723
    %v1725 = vcombine.low %v1610, %v1625
    %v1726 = vcombine.low %v1640, %v1655
    %v1727 = vcombine.low %v1670, %v1685
    %v1729 = vunpack.c.l.s4 1966171168
    %v1730 = vunpack.c.0.s8 %v1729
    %v1731 = vlaneseq
    %v1732 = vshrl.u32 %v1731, 7
    %v1733 = vsub.s32 %v1730, %v1732
    %v1734 = vrot.slane %v1725, %v1733
    %v1736 = vunpack.c.l.s4 1966171168
    %v1737 = vunpack.c.0.s8 %v1736
    %v1738 = vlaneseq
    %v1739 = vshrl.u32 %v1738, 7
    %v1740 = vsub.s32 %v1737, %v1739
    %v1741 = vrot.slane %v1726, %v1740
    %v1743 = vunpack.c.l.s4 1966171168
    %v1744 = vunpack.c.0.s8 %v1743
    %v1745 = vlaneseq
    %v1746 = vshrl.u32 %v1745, 7
    %v1747 = vsub.s32 %v1744, %v1746
    %v1748 = vrot.slane %v1727, %v1747
    %v1750 = vunpack.c.l.s4 1966171168
    %v1751 = vunpack.c.0.s8 %v1750
    %v1752 = vlaneseq
    %v1753 = vshrl.u32 %v1752, 7
    %v1754 = vsub.s32 %v1751, %v1753
    %v1755 = vrot.slane %v1700, %v1754
    %v1756 = vcombine.low %v1734, %v1741
    %v1757 = vcombine.high %v1734, %v1741
    %v1758 = vcombine.low %v1748, %v1755
    %v1759 = vcombine.high %v1748, %v1755
    %v1761 = vunpack.c.l.s4 1966171168
    %v1762 = vunpack.c.0.s8 %v1761
    %v1763 = vlaneseq
    %v1764 = vshrl.u32 %v1763, 7
    %v1765 = vsub.s32 %v1762, %v1764
    %v1766 = vrot.slane %v1756, %v1765
    %v1768 = vunpack.c.l.s4 1966171168
    %v1769 = vunpack.c.0.s8 %v1768
    %v1770 = vlaneseq
    %v1771 = vshrl.u32 %v1770, 7
    %v1772 = vsub.s32 %v1769, %v1771
    %v1773 = vrot.slane %v1757, %v1772
    %v1775 = vunpack.c.l.s4 1966171168
    %v1776 = vunpack.c.0.s8 %v1775
    %v1777 = vlaneseq
    %v1778 = vshrl.u32 %v1777, 7
    %v1779 = vsub.s32 %v1776, %v1778
    %v1780 = vrot.slane %v1758, %v1779
    %v1782 = vunpack.c.l.s4 1966171168
    %v1783 = vunpack.c.0.s8 %v1782
    %v1784 = vlaneseq
    %v1785 = vshrl.u32 %v1784, 7
    %v1786 = vsub.s32 %v1783, %v1785
    %v1787 = vrot.slane %v1759, %v1786
    %v1788 = vcombine.low %v1766, %v1780
    %v1789 = vcombine.low %v1773, %v1787
    %v1811 = vunpack.c.l.b16 %v1701
    %v1812 = vunpack.c.l.b16 %v1702
    %v1813 = vunpack.c.l.b16 %v1703
    %v1814 = vunpack.c.l.b16 %v1704
    %v1815 = vunpack.c.l.b16 %v1705
    %v1816 = vunpack.c.l.b16 %v1706
    %v1817 = vunpack.c.l.b16 %v1707
    %v1818 = vunpack.c.l.b16 %v1708
    %v1819 = vunpack.c.l.b16 %v1709
    %v1820 = vunpack.c.l.b16 %v1710
    %v1821 = vunpack.c.l.b16 %v1711
    %v1822 = vunpack.c.l.b16 %v1712
    %v1823 = vunpack.c.l.b16 %v1713
    %v1824 = vunpack.c.l.b16 %v1714
    %v1825 = vunpack.c.l.b16 %v1715
    %v1826 = vunpack.c.l.b16 %v1716
    %v1827 = vunpack.c.l.b16 %v1717
    %v1828 = vunpack.c.l.b16 %v1718
    %v1829 = vunpack.c.l.b16 %v1719
    %v1830 = vunpack.c.l.b16 %v1720
    %v1831 = vpack.c.b16 %v1812, %v1811
    %v1832 = vpack.c.b16 %v1814, %v1813
    %v1833 = vpack.c.b16 %v1816, %v1815
    %v1834 = vpack.c.b16 %v1818, %v1817
    %v1835 = vpack.c.b16 %v1820, %v1819
    %v1836 = vpack.c.b16 %v1822, %v1821
    %v1837 = vpack.c.b16 %v1824, %v1823
    %v1838 = vpack.c.b16 %v1826, %v1825
    %v1839 = vpack.c.b16 %v1828, %v1827
    %v1840 = vpack.c.b16 %v1830, %v1829
    %v1852 = vsel %vm983, %v1789, 0
    %1854 = vmatprep.subr.bf16.mxu0 0
    %1855 = vmatpush1.bf16.msra.mxu0 %v1831
    %1856 = vmatprep.subr.bf16.mxu0 0
    %1857 = vmatpush1.bf16.msra.mxu0 %v1832
    %1858 = vmatprep.subr.bf16.mxu0 0
    %1859 = vmatpush1.bf16.msra.mxu0 %v1833
    %1860 = vmatprep.subr.bf16.mxu0 0
    %1861 = vmatpush1.bf16.msra.mxu0 %v1834
    %1862 = vmatprep.subr.bf16.mxu0 0
    %1863 = vmatpush1.bf16.msra.mxu0 %v1835
    %1864 = vmatprep.subr.bf16.mxu0 0
    %1865 = vmatpush1.bf16.msra.mxu0 %v1836
    %1866 = vmatprep.subr.bf16.mxu0 0
    %1867 = vmatpush1.bf16.msra.mxu0 %v1837
    %1868 = vmatprep.subr.bf16.mxu0 0
    %1869 = vmatpush1.bf16.msra.mxu0 %v1838
    %1870 = vmatprep.subr.bf16.mxu0 0
    %1871 = vmatpush1.bf16.msra.mxu0 %v1839
    %1872 = vmatprep.subr.bf16.mxu0 0
    %1873 = vmatpush1.bf16.msra.mxu0 %v1840
    %1874 = vmatprep.subr.bf16.mxu0 0
    %1875 = vmatpush1.bf16.msra.mxu0 0
    %1876 = vmatprep.subr.bf16.mxu0 0
    %1877 = vmatpush1.bf16.msra.mxu0 0
    %1878 = vmatprep.subr.bf16.mxu0 0
    %1879 = vmatpush1.bf16.msra.mxu0 0
    %1880 = vmatprep.subr.bf16.mxu0 0
    %1881 = vmatpush1.bf16.msra.mxu0 0
    %1882 = vmatprep.subr.bf16.mxu0 0
    %1883 = vmatpush1.bf16.msra.mxu0 0
    %1884 = vmatprep.subr.bf16.mxu0 0
    %1885 = vmatpush1.bf16.msra.mxu0 0
    %1886 = vmatprep.mubr.bf16.mxu0 %v1852
    %1887 = vmatmul.mubr.bf16.gmra.mrb[0].mxu0 %v1788
    %v1888 = vpop.f32.mrb[0].mxu0
    %v1889 = vadd.f32 %v1724, %v1888
    %v1890 = vpop.f32.mrb[0].mxu0
    %v1891 = vpop.f32.mrb[0].mxu0
    %v1892 = vadd.f32 %v1724, %v1891
    %v1893 = vpop.f32.mrb[0].mxu0
    %1894 = vdwg.mxu0
    %v1895 = vmax.f32 %v1889, 0.0
    %v1896 = vmax.f32 %v1892, 0.0
    %v1897 = vpack.c.bf16 %v1896, %v1895
    %v1899 = vcombine.high %v1897, %v1897
    %v1901 = vunpack.c.l.s4 1966171168
    %v1902 = vunpack.c.0.s8 %v1901
    %v1903 = vlaneseq
    %v1904 = vshrl.u32 %v1903, 7
    %v1905 = vsub.s32 %v1902, %v1904
    %v1906 = vrot.slane %v1897, %v1905
    %v1908 = vunpack.c.l.s4 1966171168
    %v1909 = vunpack.c.0.s8 %v1908
    %v1910 = vlaneseq
    %v1911 = vshrl.u32 %v1910, 7
    %v1912 = vsub.s32 %v1909, %v1911
    %v1913 = vrot.slane %v1899, %v1912
    %v1914 = vcombine.high %v1906, %v1906
    %v1915 = vcombine.high %v1913, %v1913
    %v1917 = vunpack.c.l.s4 1966171168
    %v1918 = vunpack.c.0.s8 %v1917
    %v1919 = vlaneseq
    %v1920 = vshrl.u32 %v1919, 7
    %v1921 = vsub.s32 %v1918, %v1920
    %v1922 = vrot.slane %v1906, %v1921
    %v1924 = vunpack.c.l.s4 1966171168
    %v1925 = vunpack.c.0.s8 %v1924
    %v1926 = vlaneseq
    %v1927 = vshrl.u32 %v1926, 7
    %v1928 = vsub.s32 %v1925, %v1927
    %v1929 = vrot.slane %v1913, %v1928
    %v1931 = vunpack.c.l.s4 1966171168
    %v1932 = vunpack.c.0.s8 %v1931
    %v1933 = vlaneseq
    %v1934 = vshrl.u32 %v1933, 7
    %v1935 = vsub.s32 %v1932, %v1934
    %v1936 = vrot.slane %v1914, %v1935
    %v1938 = vunpack.c.l.s4 1966171168
    %v1939 = vunpack.c.0.s8 %v1938
    %v1940 = vlaneseq
    %v1941 = vshrl.u32 %v1940, 7
    %v1942 = vsub.s32 %v1939, %v1941
    %v1943 = vrot.slane %v1915, %v1942
    %v1944 = vcombine.high %v1922, %v1922
    %v1945 = vcombine.high %v1929, %v1929
    %v1946 = vcombine.high %v1936, %v1936
    %v1948 = vunpack.c.l.s4 1966171168
    %v1949 = vunpack.c.0.s8 %v1948
    %v1950 = vlaneseq
    %v1951 = vshrl.u32 %v1950, 7
    %v1952 = vsub.s32 %v1949, %v1951
    %v1953 = vrot.slane %v1936, %v1952
    %v1955 = vunpack.c.l.s4 1966171168
    %v1956 = vunpack.c.0.s8 %v1955
    %v1957 = vlaneseq
    %v1958 = vshrl.u32 %v1957, 7
    %v1959 = vsub.s32 %v1956, %v1958
    %v1960 = vrot.slane %v1953, %v1959
    %v1962 = vunpack.c.l.s4 1966171168
    %v1963 = vunpack.c.0.s8 %v1962
    %v1964 = vlaneseq
    %v1965 = vshrl.u32 %v1964, 7
    %v1966 = vsub.s32 %v1963, %v1965
    %v1967 = vrot.slane %v1944, %v1966
    %v1969 = vunpack.c.l.s4 1966171168
    %v1970 = vunpack.c.0.s8 %v1969
    %v1971 = vlaneseq
    %v1972 = vshrl.u32 %v1971, 7
    %v1973 = vsub.s32 %v1970, %v1972
    %v1974 = vrot.slane %v1967, %v1973
    %v1976 = vunpack.c.l.s4 1966171168
    %v1977 = vunpack.c.0.s8 %v1976
    %v1978 = vlaneseq
    %v1979 = vshrl.u32 %v1978, 7
    %v1980 = vsub.s32 %v1977, %v1979
    %v1981 = vrot.slane %v1946, %v1980
    %v1983 = vunpack.c.l.s4 1966171168
    %v1984 = vunpack.c.0.s8 %v1983
    %v1985 = vlaneseq
    %v1986 = vshrl.u32 %v1985, 7
    %v1987 = vsub.s32 %v1984, %v1986
    %v1988 = vrot.slane %v1981, %v1987
    %1989 = vrot.lane.b32.xlu0 %v1960, 32
    %v1990 = vpop.permute.xlu0 %1989
    %1991 = vrot.lane.b32.xlu0 %v1974, 32
    %v1992 = vpop.permute.xlu0 %1991
    %1993 = vrot.lane.b32.xlu0 %v1988, 32
    %v1994 = vpop.permute.xlu0 %1993
    %v1996 = vunpack.c.l.s4 1966171168
    %v1997 = vunpack.c.0.s8 %v1996
    %v1998 = vlaneseq
    %v1999 = vshrl.u32 %v1998, 7
    %v2000 = vsub.s32 %v1997, %v1999
    %v2001 = vrot.slane %v1929, %v2000
    %v2003 = vunpack.c.l.s4 1966171168
    %v2004 = vunpack.c.0.s8 %v2003
    %v2005 = vlaneseq
    %v2006 = vshrl.u32 %v2005, 7
    %v2007 = vsub.s32 %v2004, %v2006
    %v2008 = vrot.slane %v2001, %v2007
    %2009 = vrot.lane.b32.xlu0 %v1974, 64
    %v2010 = vpop.permute.xlu0 %2009
    %2011 = vrot.lane.b32.xlu0 %v1988, 64
    %v2012 = vpop.permute.xlu0 %2011
    %2013 = vrot.lane.b32.xlu0 %v2008, 64
    %v2014 = vpop.permute.xlu0 %2013
    %v2016 = vunpack.c.l.s4 1966171168
    %v2017 = vunpack.c.0.s8 %v2016
    %v2018 = vlaneseq
    %v2019 = vshrl.u32 %v2018, 7
    %v2020 = vsub.s32 %v2017, %v2019
    %v2021 = vrot.slane %v1943, %v2020
    %v2023 = vunpack.c.l.s4 1966171168
    %v2024 = vunpack.c.0.s8 %v2023
    %v2025 = vlaneseq
    %v2026 = vshrl.u32 %v2025, 7
    %v2027 = vsub.s32 %v2024, %v2026
    %v2028 = vrot.slane %v2021, %v2027
    %2029 = vrot.lane.b32.xlu0 %v1988, 96
    %v2030 = vpop.permute.xlu0 %2029
    %2031 = vrot.lane.b32.xlu0 %v2008, 96
    %v2032 = vpop.permute.xlu0 %2031
    %2033 = vrot.lane.b32.xlu0 %v2028, 96
    %v2034 = vpop.permute.xlu0 %2033
    %v2037 = vsel %vm983, %v1922, %v1990
    %v2040 = vsel %vm983, %v1936, %v1992
    %v2043 = vsel %vm983, %v1944, %v1994
    %v2045 = vsel %vm178, %v2037, %v2010
    %v2047 = vsel %vm178, %v2040, %v2012
    %v2049 = vsel %vm178, %v2043, %v2014
    %v2051 = vsel %vm1574, %v2045, %v2030
    %v2053 = vsel %vm1574, %v2047, %v2032
    %v2055 = vsel %vm1574, %v2049, %v2034
    %v2059 = vcombine.low %v2051, %v1929
    %v2061 = vunpack.c.l.s4 1966171168
    %v2062 = vunpack.c.0.s8 %v2061
    %v2063 = vlaneseq
    %v2064 = vshrl.u32 %v2063, 7
    %v2065 = vsub.s32 %v2062, %v2064
    %v2066 = vrot.slane %v2059, %v2065
    %v2068 = vunpack.c.l.s4 1966171168
    %v2069 = vunpack.c.0.s8 %v2068
    %v2070 = vlaneseq
    %v2071 = vshrl.u32 %v2070, 7
    %v2072 = vsub.s32 %v2069, %v2071
    %v2073 = vrot.slane %v2066, %v2072
    %v2074 = vcombine.low %v2053, %v1943
    %v2076 = vunpack.c.l.s4 1966171168
    %v2077 = vunpack.c.0.s8 %v2076
    %v2078 = vlaneseq
    %v2079 = vshrl.u32 %v2078, 7
    %v2080 = vsub.s32 %v2077, %v2079
    %v2081 = vrot.slane %v2074, %v2080
    %v2083 = vunpack.c.l.s4 1966171168
    %v2084 = vunpack.c.0.s8 %v2083
    %v2085 = vlaneseq
    %v2086 = vshrl.u32 %v2085, 7
    %v2087 = vsub.s32 %v2084, %v2086
    %v2088 = vrot.slane %v2081, %v2087
    %v2089 = vcombine.low %v2055, %v1945
    %v2091 = vunpack.c.l.s4 1966171168
    %v2092 = vunpack.c.0.s8 %v2091
    %v2093 = vlaneseq
    %v2094 = vshrl.u32 %v2093, 7
    %v2095 = vsub.s32 %v2092, %v2094
    %v2096 = vrot.slane %v2089, %v2095
    %v2098 = vunpack.c.l.s4 1966171168
    %v2099 = vunpack.c.0.s8 %v2098
    %v2100 = vlaneseq
    %v2101 = vshrl.u32 %v2100, 7
    %v2102 = vsub.s32 %v2099, %v2101
    %v2103 = vrot.slane %v2096, %v2102
    %v2104 = vld [vmem:[%s1 + $0x120] sm:$0xf]
    %v2105 = vld [vmem:[%s1 + $0x124] sm:$0xf]
    %v2106 = vld [vmem:[%s1 + $0x128] sm:$0xf]
    %v2107 = vld [vmem:[%s1 + $0x12c] sm:$0xf]
    %v2108 = vld [vmem:[%s1 + $0x130] sm:$0xf]
    %v2109 = vld [vmem:[%s1 + $0x134] sm:$0xf]
    %v2110 = vld [vmem:[%s1 + $0x138] sm:$0xf]
    %v2111 = vld [vmem:[%s1 + $0x13c] sm:$0xf]
    %v2112 = vld [vmem:[%s1 + $0x140] sm:$0xf]
    %v2113 = vld [vmem:[%s1 + $0x144] sm:$0xf]
    %v2114 = vld [vmem:[%s1 + $0x148] sm:$0xf]
    %v2115 = vld [vmem:[%s1 + $0x14c] sm:$0xf]
    %v2116 = vld [vmem:[%s1 + $0x150] sm:$0xf]
    %v2117 = vld [vmem:[%s1 + $0x154] sm:$0xf]
    %v2118 = vld [vmem:[%s1 + $0x158] sm:$0xf]
    %v2119 = vld [vmem:[%s1 + $0x15c] sm:$0xf]
    %v2120 = vld [vmem:[%s1 + $0x160] sm:$0xf]
    %v2121 = vld [vmem:[%s1 + $0x164] sm:$0xf]
    %v2122 = vld [vmem:[%s1 + $0x168] sm:$0xf]
    %v2123 = vld [vmem:[%s1 + $0x16c] sm:$0xf]
    %v2124 = vld [vmem:[%s1 + $0x1a0] sm:$0x4]
    %v2125 = vunpack.c.l.bf16 %v2124
    %v2126 = vlaneseq
    %v2127 = vshrl.u32 %v2126, 7
    %v2128 = vsub.s32 4, %v2127
    %v2129 = vrot.slane %v2125, %v2128
    %v2130 = vcombine.low %v2073, %v2088
    %v2132 = vunpack.c.l.s4 1966171168
    %v2133 = vunpack.c.0.s8 %v2132
    %v2134 = vlaneseq
    %v2135 = vshrl.u32 %v2134, 7
    %v2136 = vsub.s32 %v2133, %v2135
    %v2137 = vrot.slane %v2130, %v2136
    %v2139 = vunpack.c.l.s4 1966171168
    %v2140 = vunpack.c.0.s8 %v2139
    %v2141 = vlaneseq
    %v2142 = vshrl.u32 %v2141, 7
    %v2143 = vsub.s32 %v2140, %v2142
    %v2144 = vrot.slane %v2103, %v2143
    %v2145 = vcombine.low %v2137, %v2144
    %v2146 = vcombine.high %v2137, %v2144
    %v2148 = vunpack.c.l.s4 1966171168
    %v2149 = vunpack.c.0.s8 %v2148
    %v2150 = vlaneseq
    %v2151 = vshrl.u32 %v2150, 7
    %v2152 = vsub.s32 %v2149, %v2151
    %v2153 = vrot.slane %v2145, %v2152
    %v2155 = vunpack.c.l.s4 1966171168
    %v2156 = vunpack.c.0.s8 %v2155
    %v2157 = vlaneseq
    %v2158 = vshrl.u32 %v2157, 7
    %v2159 = vsub.s32 %v2156, %v2158
    %v2160 = vrot.slane %v2146, %v2159
    %v2182 = vunpack.c.l.b16 %v2104
    %v2183 = vunpack.c.l.b16 %v2105
    %v2184 = vunpack.c.l.b16 %v2106
    %v2185 = vunpack.c.l.b16 %v2107
    %v2186 = vunpack.c.l.b16 %v2108
    %v2187 = vunpack.c.l.b16 %v2109
    %v2188 = vunpack.c.l.b16 %v2110
    %v2189 = vunpack.c.l.b16 %v2111
    %v2190 = vunpack.c.l.b16 %v2112
    %v2191 = vunpack.c.l.b16 %v2113
    %v2192 = vunpack.c.l.b16 %v2114
    %v2193 = vunpack.c.l.b16 %v2115
    %v2194 = vunpack.c.l.b16 %v2116
    %v2195 = vunpack.c.l.b16 %v2117
    %v2196 = vunpack.c.l.b16 %v2118
    %v2197 = vunpack.c.l.b16 %v2119
    %v2198 = vunpack.c.l.b16 %v2120
    %v2199 = vunpack.c.l.b16 %v2121
    %v2200 = vunpack.c.l.b16 %v2122
    %v2201 = vunpack.c.l.b16 %v2123
    %v2202 = vpack.c.b16 %v2183, %v2182
    %v2203 = vpack.c.b16 %v2185, %v2184
    %v2204 = vpack.c.b16 %v2187, %v2186
    %v2205 = vpack.c.b16 %v2189, %v2188
    %v2206 = vpack.c.b16 %v2191, %v2190
    %v2207 = vpack.c.b16 %v2193, %v2192
    %v2208 = vpack.c.b16 %v2195, %v2194
    %v2209 = vpack.c.b16 %v2197, %v2196
    %v2210 = vpack.c.b16 %v2199, %v2198
    %v2211 = vpack.c.b16 %v2201, %v2200
    %v2223 = vsel %vm983, %v2160, 0
    %2225 = vmatprep.subr.bf16.mxu0 0
    %2226 = vmatpush1.bf16.msra.mxu0 %v2202
    %2227 = vmatprep.subr.bf16.mxu0 0
    %2228 = vmatpush1.bf16.msra.mxu0 %v2203
    %2229 = vmatprep.subr.bf16.mxu0 0
    %2230 = vmatpush1.bf16.msra.mxu0 %v2204
    %2231 = vmatprep.subr.bf16.mxu0 0
    %2232 = vmatpush1.bf16.msra.mxu0 %v2205
    %2233 = vmatprep.subr.bf16.mxu0 0
    %2234 = vmatpush1.bf16.msra.mxu0 %v2206
    %2235 = vmatprep.subr.bf16.mxu0 0
    %2236 = vmatpush1.bf16.msra.mxu0 %v2207
    %2237 = vmatprep.subr.bf16.mxu0 0
    %2238 = vmatpush1.bf16.msra.mxu0 %v2208
    %2239 = vmatprep.subr.bf16.mxu0 0
    %2240 = vmatpush1.bf16.msra.mxu0 %v2209
    %2241 = vmatprep.subr.bf16.mxu0 0
    %2242 = vmatpush1.bf16.msra.mxu0 %v2210
    %2243 = vmatprep.subr.bf16.mxu0 0
    %2244 = vmatpush1.bf16.msra.mxu0 %v2211
    %2245 = vmatprep.subr.bf16.mxu0 0
    %2246 = vmatpush1.bf16.msra.mxu0 0
    %2247 = vmatprep.subr.bf16.mxu0 0
    %2248 = vmatpush1.bf16.msra.mxu0 0
    %2249 = vmatprep.subr.bf16.mxu0 0
    %2250 = vmatpush1.bf16.msra.mxu0 0
    %2251 = vmatprep.subr.bf16.mxu0 0
    %2252 = vmatpush1.bf16.msra.mxu0 0
    %2253 = vmatprep.subr.bf16.mxu0 0
    %2254 = vmatpush1.bf16.msra.mxu0 0
    %2255 = vmatprep.subr.bf16.mxu0 0
    %2256 = vmatpush1.bf16.msra.mxu0 0
    %2257 = vmatprep.mubr.bf16.mxu0 %v2223
    %2258 = vmatmul.mubr.bf16.gmra.mrb[0].mxu0 %v2153
    %v2259 = vpop.f32.mrb[0].mxu0
    %v2260 = vadd.f32 %v2129, %v2259
    %v2261 = vpop.f32.mrb[0].mxu0
    %v2262 = vpop.f32.mrb[0].mxu0
    %v2263 = vpop.f32.mrb[0].mxu0
    %2264 = vdwg.mxu0
    %v2265 = vmax.f32 %v2260, 0.0
    %v2266 = vpack.c.bf16 %v2265, %v2265
    %v2269 = vunpack.c.l.s4 1966171168
    %v2270 = vunpack.c.0.s8 %v2269
    %v2271 = vlaneseq
    %v2272 = vshrl.u32 %v2271, 7
    %v2273 = vsub.s32 %v2270, %v2272
    %v2274 = vrot.slane %v2266, %v2273
    %v2275 = vcombine.high %v2274, %v2274
    %v2277 = vunpack.c.l.s4 1966171168
    %v2278 = vunpack.c.0.s8 %v2277
    %v2279 = vlaneseq
    %v2280 = vshrl.u32 %v2279, 7
    %v2281 = vsub.s32 %v2278, %v2280
    %v2282 = vrot.slane %v2274, %v2281
    %v2284 = vunpack.c.l.s4 1966171168
    %v2285 = vunpack.c.0.s8 %v2284
    %v2286 = vlaneseq
    %v2287 = vshrl.u32 %v2286, 7
    %v2288 = vsub.s32 %v2285, %v2287
    %v2289 = vrot.slane %v2275, %v2288
    %v2290 = vcombine.high %v2282, %v2282
    %v2292 = vunpack.c.l.s4 1966171168
    %v2293 = vunpack.c.0.s8 %v2292
    %v2294 = vlaneseq
    %v2295 = vshrl.u32 %v2294, 7
    %v2296 = vsub.s32 %v2293, %v2295
    %v2297 = vrot.slane %v2289, %v2296
    %v2299 = vunpack.c.l.s4 1966171168
    %v2300 = vunpack.c.0.s8 %v2299
    %v2301 = vlaneseq
    %v2302 = vshrl.u32 %v2301, 7
    %v2303 = vsub.s32 %v2300, %v2302
    %v2304 = vrot.slane %v2297, %v2303
    %2305 = vrot.lane.b32.xlu0 %v2304, 32
    %v2306 = vpop.permute.xlu0 %2305
    %v2308 = vunpack.c.l.s4 1966171168
    %v2309 = vunpack.c.0.s8 %v2308
    %v2310 = vlaneseq
    %v2311 = vshrl.u32 %v2310, 7
    %v2312 = vsub.s32 %v2309, %v2311
    %v2313 = vrot.slane %v2290, %v2312
    %v2315 = vunpack.c.l.s4 1966171168
    %v2316 = vunpack.c.0.s8 %v2315
    %v2317 = vlaneseq
    %v2318 = vshrl.u32 %v2317, 7
    %v2319 = vsub.s32 %v2316, %v2318
    %v2320 = vrot.slane %v2313, %v2319
    %2321 = vrot.lane.b32.xlu0 %v2320, 64
    %v2322 = vpop.permute.xlu0 %2321
    %v2325 = vsel %vm983, %v2282, %v2306
    %v2327 = vsel %vm178, %v2325, %v2322
    %v2328 = vld [vmem:[%s1 + $0x170] sm:$0xf]
    %v2329 = vld [vmem:[%s1 + $0x174] sm:$0xf]
    %v2330 = vld [vmem:[%s1 + $0x178] sm:$0xf]
    %v2331 = vld [vmem:[%s1 + $0x17c] sm:$0xf]
    %v2332 = vld [vmem:[%s1 + $0x180] sm:$0xf]
    %v2333 = vld [vmem:[%s1 + $0x184] sm:$0xf]
    %v2334 = vld [vmem:[%s1 + $0x188] sm:$0xf]
    %v2335 = vld [vmem:[%s1 + $0x18c] sm:$0xf]
    %v2336 = vld [vmem:[%s1 + $0x190] sm:$0xf]
    %v2337 = vld [vmem:[%s1 + $0x194] sm:$0xf]
    %v2338 = vld [vmem:[%s1 + $0x198] sm:$0xf]
    %v2339 = vld [vmem:[%s1 + $0x19c] sm:$0xf]
    %v2340 = vld [vmem:[%s1 + $0x1a0] sm:$0x4]
    %v2341 = vunpack.c.l.bf16 %v2340
    %v2342 = vlaneseq
    %v2343 = vshrl.u32 %v2342, 7
    %v2344 = vsub.s32 5, %v2343
    %v2345 = vrot.slane %v2341, %v2344
    %v2358 = vunpack.c.l.b16 %v2328
    %v2359 = vunpack.c.l.b16 %v2329
    %v2360 = vunpack.c.l.b16 %v2330
    %v2361 = vunpack.c.l.b16 %v2331
    %v2362 = vunpack.c.l.b16 %v2332
    %v2363 = vunpack.c.l.b16 %v2333
    %v2364 = vunpack.c.l.b16 %v2334
    %v2365 = vunpack.c.l.b16 %v2335
    %v2366 = vunpack.c.l.b16 %v2336
    %v2367 = vunpack.c.l.b16 %v2337
    %v2368 = vunpack.c.l.b16 %v2338
    %v2369 = vunpack.c.l.b16 %v2339
    %v2370 = vpack.c.b16 %v2359, %v2358
    %v2371 = vpack.c.b16 %v2361, %v2360
    %v2372 = vpack.c.b16 %v2363, %v2362
    %v2373 = vpack.c.b16 %v2365, %v2364
    %v2374 = vpack.c.b16 %v2367, %v2366
    %v2375 = vpack.c.b16 %v2369, %v2368
    %v2382 = vsel %vm1574, %v2327, 0
    %2384 = vmatprep.subr.bf16.mxu0 0
    %2385 = vmatpush1.bf16.msra.mxu0 %v2370
    %2386 = vmatprep.subr.bf16.mxu0 0
    %2387 = vmatpush1.bf16.msra.mxu0 %v2371
    %2388 = vmatprep.subr.bf16.mxu0 0
    %2389 = vmatpush1.bf16.msra.mxu0 %v2372
    %2390 = vmatprep.subr.bf16.mxu0 0
    %2391 = vmatpush1.bf16.msra.mxu0 %v2373
    %2392 = vmatprep.subr.bf16.mxu0 0
    %2393 = vmatpush1.bf16.msra.mxu0 %v2374
    %2394 = vmatprep.subr.bf16.mxu0 0
    %2395 = vmatpush1.bf16.msra.mxu0 %v2375
    %2396 = vmatprep.subr.bf16.mxu0 0
    %2397 = vmatpush1.bf16.msra.mxu0 0
    %2398 = vmatprep.subr.bf16.mxu0 0
    %2399 = vmatpush1.bf16.msra.mxu0 0
    %2400 = vmatprep.subr.bf16.mxu0 0
    %2401 = vmatpush1.bf16.msra.mxu0 0
    %2402 = vmatprep.subr.bf16.mxu0 0
    %2403 = vmatpush1.bf16.msra.mxu0 0
    %2404 = vmatprep.subr.bf16.mxu0 0
    %2405 = vmatpush1.bf16.msra.mxu0 0
    %2406 = vmatprep.subr.bf16.mxu0 0
    %2407 = vmatpush1.bf16.msra.mxu0 0
    %2408 = vmatprep.subr.bf16.mxu0 0
    %2409 = vmatpush1.bf16.msra.mxu0 0
    %2410 = vmatprep.subr.bf16.mxu0 0
    %2411 = vmatpush1.bf16.msra.mxu0 0
    %2412 = vmatprep.subr.bf16.mxu0 0
    %2413 = vmatpush1.bf16.msra.mxu0 0
    %2414 = vmatprep.subr.bf16.mxu0 0
    %2415 = vmatpush1.bf16.msra.mxu0 0
    %2416 = vmatprep.mubr.bf16.mxu0 0
    %2417 = vmatmul.mubr.bf16.gmra.mrb[0].mxu0 %v2382
    %v2418 = vpop.f32.mrb[0].mxu0
    %v2419 = vadd.f32 %v2345, %v2418
    %v2420 = vpop.f32.mrb[0].mxu0
    %v2421 = vpop.f32.mrb[0].mxu0
    %v2422 = vpop.f32.mrb[0].mxu0
    %2423 = vdwg.mxu0
    %vm2424 = vcmask 254976
    %2425 = vst.msk [vmem:[#allocation2] sm:$0x3] %vm2424, %v2419
    // Predicated region
    $region10: #{tpu_custom_call.1} parent=1 // pred_check
      _
    $region11: #{tpu_custom_call.1} parent=1 // pred_check_branch
      %2427 = sbr.rel (0) target = $region13
    $region12: #{tpu_custom_call.1} parent=1 // pred_region
      %s2429 = ssub.s32 32, 32
      %2430 = vsyncadd [#allocation3], %s2429
      %s2432 = sshll.u32 [#allocation2], 4
      %s2433 = int_to_ptr.vmem [resolvable:$true] %s2432
      %2435 = dma.vmem_to_hbm [thread:$0]  %s2433, 32, %s2, [#allocation3]
    $region13: #{tpu_custom_call.1} parent=1 // pred_fallthru
      _
    // Predicated region
    $region14: #{tpu_custom_call.1} parent=1 // pred_check
      _
    $region15: #{tpu_custom_call.1} parent=1 // pred_check_branch
      %2437 = sbr.rel (0) target = $region17
    $region16: #{tpu_custom_call.1} parent=1 // pred_region
      %2438 = dma.done [#allocation3], 32
    $region17: #{tpu_custom_call.1} parent=1 // pred_fallthru
      _
    %2439 = vsyncpa [#allocation3], 1

</llo_original>
